<compile_context>
chip_gen: v5e
topology: v5e:2x2
jax: 0.10.0
libtpu: 0.0.40
codegen_flags: <defaults>
</compile_context>

<pallas_src>
import functools
import math

import jax
import jax.numpy as jnp
from jax.experimental import pallas as pl
from jax.experimental.pallas import tpu as pltpu

LN_EPS = 1e-5   # PyTorch nn.LayerNorm default
LANE = 128


def _round_up(x, m):
    return ((x + m - 1) // m) * m


def _default_tail_dtype():
    """bf16 LN/ReLU tail on chips with a bf16 VPU (v6e/v7x); f32 on v5e and older."""
    try:
        kind = jax.devices()[0].device_kind.lower()
    except Exception:
        kind = ""
    if any(v in kind for v in ("v2", "v3", "v4", "v5")):
        return jnp.float32
    return jnp.bfloat16


# --------------------------------------------------------------------------------------
# Kernel
# --------------------------------------------------------------------------------------
def _ln_relu_tail(h, g_ref, be_ref, inv_nh, tail_dtype, mxu_dtype):
    """LayerNorm stats in f32 over the logical nh lanes; normalize/affine/ReLU in tail_dtype."""
    # Padded lanes of h are exactly 0, so sums over all 128 lanes equal sums over the nh
    # valid lanes; divide by the logical nh.
    s = jnp.sum(h, axis=-1, keepdims=True)
    s2 = jnp.sum(h * h, axis=-1, keepdims=True)
    mean = s * inv_nh
    var = jnp.maximum(s2 * inv_nh - mean * mean, 0.0)
    inv = jax.lax.rsqrt(var + LN_EPS)
    hn = ((h - mean) * inv).astype(tail_dtype)
    # gamma/beta are 0 in padded lanes -> padded lanes of the result stay exactly 0.
    hn = hn * g_ref[...].astype(tail_dtype) + be_ref[...].astype(tail_dtype)
    hn = jnp.maximum(hn, jnp.zeros((), tail_dtype))
    return hn.astype(mxu_dtype)   # back to bf16 for the next MXU matmul


def _linear_ln_relu(h_in, w_ref, b_ref, g_ref, be_ref, inv_nh, tail_dtype):
    h = jnp.dot(h_in, w_ref[...], preferred_element_type=jnp.float32) + b_ref[...]
    return _ln_relu_tail(h, g_ref, be_ref, inv_nh, tail_dtype, w_ref.dtype)


def encoder_kernel(x_ref,
                   w1_ref, b1_ref, g1_ref, be1_ref,
                   w2_ref, b2_ref, g2_ref, be2_ref,
                   w3_ref, b3_ref, g3_ref, be3_ref,
                   w4_ref, b4_ref,
                   out_ref, acc_ref, *, nh, tail_dtype):
    k = pl.program_id(1)

    @pl.when(k == 0)
    def _():
        acc_ref[...] = jnp.zeros_like(acc_ref)

    # Layer 1, partial over this K tile.  x is streamed in its HBM dtype and cast to the
    # MXU dtype here (no wrapper-side pad/cast pass over x in HBM).
    acc_ref[...] += jnp.dot(x_ref[...].astype(w1_ref.dtype), w1_ref[...],
                            preferred_element_type=jnp.float32)

    @pl.when(k == pl.num_programs(1) - 1)
    def _():
        inv_nh = 1.0 / float(nh)
        h = _ln_relu_tail(acc_ref[...] + b1_ref[...], g1_ref, be1_ref, inv_nh,
                          tail_dtype, w2_ref.dtype)
        h = _linear_ln_relu(h, w2_ref, b2_ref, g2_ref, be2_ref, inv_nh, tail_dtype)
        h = _linear_ln_relu(h, w3_ref, b3_ref, g3_ref, be3_ref, inv_nh, tail_dtype)
        out = jnp.dot(h, w4_ref[...], preferred_element_type=jnp.float32) + b4_ref[...]
        out_ref[...] = out.astype(out_ref.dtype)


# --------------------------------------------------------------------------------------
# Tiling plan + one-time parameter preparation (hoisted out of the per-call path)
# --------------------------------------------------------------------------------------
def _plan_tiles(d_in, nh, nz, block_b, *, x_itemsize=4, stream_itemsize=2,
                streamed_vmem_budget=20 * (1 << 20)):
    """Pick feature padding, max batch tile and the layer-1 K tile so the streamed
    (double-buffered) x + w1 tiles stay inside a conservative VMEM budget (safe on v7x's
    64 MiB physical / 32 MiB default-scoped VMEM)."""
    nh_pad = _round_up(nh, LANE)
    nz_pad = _round_up(nz, LANE)
    d128 = _round_up(d_in, LANE)
    tb_max = _round_up(block_b, 16)

    def streamed_bytes(tk):
        return 2 * (tb_max * tk * x_itemsize) + 2 * (tk * nh_pad * stream_itemsize)

    if streamed_bytes(d128) <= streamed_vmem_budget:
        tk = d128                                    # w1 fully resident, single K step
    else:
        per_col = 2 * (tb_max * x_itemsize + nh_pad * stream_itemsize)
        tk = max(LANE, (streamed_vmem_budget // per_col) // LANE * LANE)
        tk = min(tk, d128)
    d_pad = _round_up(d_in, tk)
    return dict(TB_MAX=tb_max, TK=tk, D_PAD=d_pad, NH_PAD=nh_pad, NZ_PAD=nz_pad)


def prepare_encoder_params(params, *, d_in, nh, nz, block_b=1024,
                           stream_dtype=jnp.bfloat16, tail_dtype=None):
    """Pad + cast all weights/biases ONCE (call at init, not per forward)."""
    if tail_dtype is None:
        tail_dtype = _default_tail_dtype()
    plan = _plan_tiles(d_in, nh, nz, block_b)
    D_PAD, NH_PAD, NZ_PAD = plan["D_PAD"], plan["NH_PAD"], plan["NZ_PAD"]

    def pad_w(w, rows, cols):
        out = jnp.zeros((rows, cols), stream_dtype)
        return out.at[: w.shape[0], : w.shape[1]].set(w.astype(stream_dtype))

    def pad_v(v, cols):  # biases / gamma / beta stay f32 (consumed by f32 accumulators)
        out = jnp.zeros((1, cols), jnp.float32)
        return out.at[:, : v.shape[1]].set(v.astype(jnp.float32))

    args = (
        pad_w(params["w1"], D_PAD, NH_PAD), pad_v(params["b1"], NH_PAD),
        pad_v(params["g1"], NH_PAD), pad_v(params["be1"], NH_PAD),
        pad_w(params["w2"], NH_PAD, NH_PAD), pad_v(params["b2"], NH_PAD),
        pad_v(params["g2"], NH_PAD), pad_v(params["be2"], NH_PAD),
        pad_w(params["w3"], NH_PAD, NH_PAD), pad_v(params["b3"], NH_PAD),
        pad_v(params["g3"], NH_PAD), pad_v(params["be3"], NH_PAD),
        pad_w(params["w4"], NH_PAD, NZ_PAD), pad_v(params["b4"], NZ_PAD),
    )
    return dict(args=args, plan=plan, nh=nh, nz=nz, d_in=d_in, tail_dtype=tail_dtype)


# --------------------------------------------------------------------------------------
# Forward
# --------------------------------------------------------------------------------------
def encoder_forward(x_nchw, prepared):
    args_p = prepared["args"]
    plan = prepared["plan"]
    nh, nz, d_in = prepared["nh"], prepared["nz"], prepared["d_in"]
    tail_dtype = prepared["tail_dtype"]

    B = x_nchw.shape[0]
    x2d = x_nchw.reshape(B, -1)                       # nn.Flatten on NCHW (C-order)
    assert x2d.shape[1] == d_in, "input spatial/channel dims do not match prepared params"

    D_PAD, TK = plan["D_PAD"], plan["TK"]
    NH_PAD, NZ_PAD = plan["NH_PAD"], plan["NZ_PAD"]

    # Batch tile: multiple of 16, capped so the grid has >= 2 batch tiles (both v7x TCs busy).
    TB = min(plan["TB_MAX"], max(16, _round_up(-(-B // 2), 16)))
    B_PAD = _round_up(B, TB)

    # Pad x only if actually needed (common case D % 128 == 0, B % TB == 0 -> no copy).
    if B_PAD != B or D_PAD != d_in:
        x2d = jnp.pad(x2d, ((0, B_PAD - B), (0, D_PAD - d_in)))

    kt = D_PAD // TK
    grid = (B_PAD // TB, kt)

    x_spec = pl.BlockSpec((TB, TK), lambda i, k: (i, k))
    if kt == 1:
        # w1 never changes block -> single-buffer it (halves its VMEM footprint).
        w1_spec = pl.BlockSpec((TK, NH_PAD), lambda i, k: (k, 0),
                               pipeline_mode=pl.Buffered(1))
    else:
        w1_spec = pl.BlockSpec((TK, NH_PAD), lambda i, k: (k, 0))

    def resident(a):
        # Constant index_map -> VMEM-resident across the grid; single-buffered.
        return pl.BlockSpec(a.shape, lambda i, k, _n=a.ndim: (0,) * _n,
                            pipeline_mode=pl.Buffered(1))

    in_specs = [x_spec, w1_spec] + [resident(a) for a in args_p[1:]]
    out_spec = pl.BlockSpec((TB, NZ_PAD), lambda i, k: (i, 0))    # lane-dense output

    flops = 2 * B_PAD * (D_PAD * NH_PAD + 2 * NH_PAD * NH_PAD + NH_PAD * NZ_PAD)
    bytes_accessed = (int(x2d.size) * x2d.dtype.itemsize
                      + sum(int(a.size) * a.dtype.itemsize for a in args_p)
                      + B_PAD * NZ_PAD * 4)
    cost = pl.CostEstimate(flops=flops, transcendentals=3 * B_PAD,
                           bytes_accessed=bytes_accessed)

    out = pl.pallas_call(
        functools.partial(encoder_kernel, nh=nh, tail_dtype=tail_dtype),
        out_shape=jax.ShapeDtypeStruct((B_PAD, NZ_PAD), jnp.float32),
        grid=grid,
        in_specs=in_specs,
        out_specs=out_spec,
        scratch_shapes=[pltpu.VMEM((TB, NH_PAD), jnp.float32)],   # layer-1 f32 accumulator
        compiler_params=pltpu.CompilerParams(
            dimension_semantics=("parallel", "arbitrary")),
        cost_estimate=cost,
    )(x2d, *args_p)

    return out[:B, :nz]


# --------------------------------------------------------------------------------------
# Init + pure-JAX reference + self-test
# --------------------------------------------------------------------------------------
def init_encoder_params(key, size, nx, nh, nz):
    """Deterministic init mimicking PyTorch nn.Linear defaults (uniform(+-1/sqrt(fan_in)))."""
    d_in = nx * size * size
    dims = [(d_in, nh), (nh, nh), (nh, nh), (nh, nz)]
    params = {}
    for i, (fi, fo) in enumerate(dims, start=1):
        key, kw, kb = jax.random.split(key, 3)
        bound = 1.0 / math.sqrt(fi)
        params[f"w{i}"] = jax.random.uniform(kw, (fi, fo), jnp.float32, -bound, bound)
        params[f"b{i}"] = jax.random.uniform(kb, (1, fo), jnp.float32, -bound, bound)
    for i in range(1, 4):   # LayerNorm affine params (gamma=1, beta=0 like PyTorch init)
        params[f"g{i}"] = jnp.ones((1, nh), jnp.float32)
        params[f"be{i}"] = jnp.zeros((1, nh), jnp.float32)
    return params


def encoder_ref(x_nchw, params, *, cast_dtype=None, tail_dtype=jnp.float32):
    """Pure-JAX reference. cast_dtype/tail_dtype mirror the kernel's matmul / LN-tail precision."""
    B = x_nchw.shape[0]
    h = x_nchw.reshape(B, -1).astype(jnp.float32)

    def mm(a, w):
        if cast_dtype is not None:
            a = a.astype(cast_dtype)
            w = w.astype(cast_dtype)
        return jnp.dot(a, w, preferred_element_type=jnp.float32)

    for i in range(1, 4):
        h = mm(h, params[f"w{i}"]) + params[f"b{i}"]
        mean = jnp.mean(h, axis=-1, keepdims=True)
        var = jnp.mean((h - mean) ** 2, axis=-1, keepdims=True)
        hn = ((h - mean) * jax.lax.rsqrt(var + LN_EPS)).astype(tail_dtype)
        hn = hn * params[f"g{i}"].astype(tail_dtype) + params[f"be{i}"].astype(tail_dtype)
        h = jnp.maximum(hn, jnp.zeros((), tail_dtype)).astype(jnp.float32)
    return mm(h, params["w4"]) + params["b4"]


if __name__ == "__main__":
    # Small shapes consistent with the module: x is NCHW [B, nx, size, size]
    B, nx, size = 2, 4, 16
    nh, nz = 32, 8

    key = jax.random.PRNGKey(0)
    kx, kp = jax.random.split(key)
    x = jax.random.normal(kx, (B, nx, size, size), jnp.float32)
    params = init_encoder_params(kp, size, nx, nh, nz)

    # One-time weight padding/cast (hoisted out of the per-forward path).
    prepared = prepare_encoder_params(params, d_in=nx * size * size, nh=nh, nz=nz)

    out = encoder_forward(x, prepared)
    out = jax.block_until_ready(out)
    assert out.shape == (B, nz)

    # Check against a reference matching the kernel's matmul/tail precision, plus a looser
    # sanity check against the pure-f32 (PyTorch-equivalent) math.
    ref_matched = encoder_ref(x, params, cast_dtype=jnp.bfloat16,
                              tail_dtype=prepared["tail_dtype"])
    ref_f32 = encoder_ref(x, params)
    assert jnp.allclose(out, ref_matched, atol=1e-2, rtol=1e-2), "mismatch vs precision-matched reference"
    assert jnp.allclose(out, ref_f32, atol=5e-2, rtol=5e-2), "mismatch vs f32 reference"

    print("KERNEL_OK")
</pallas_src>

<mosaic_0001>
module attributes {stable_mosaic.version = 11 : i64} {
  func.func @encoder_kernel(%arg0: i32, %arg1: i32, %arg2: memref<16x1024xf32, #tpu.memory_space<vmem>>, %arg3: memref<1024x128xbf16, #tpu.memory_space<vmem>>, %arg4: memref<1x128xf32, #tpu.memory_space<vmem>>, %arg5: memref<1x128xf32, #tpu.memory_space<vmem>>, %arg6: memref<1x128xf32, #tpu.memory_space<vmem>>, %arg7: memref<128x128xbf16, #tpu.memory_space<vmem>>, %arg8: memref<1x128xf32, #tpu.memory_space<vmem>>, %arg9: memref<1x128xf32, #tpu.memory_space<vmem>>, %arg10: memref<1x128xf32, #tpu.memory_space<vmem>>, %arg11: memref<128x128xbf16, #tpu.memory_space<vmem>>, %arg12: memref<1x128xf32, #tpu.memory_space<vmem>>, %arg13: memref<1x128xf32, #tpu.memory_space<vmem>>, %arg14: memref<1x128xf32, #tpu.memory_space<vmem>>, %arg15: memref<128x128xbf16, #tpu.memory_space<vmem>>, %arg16: memref<1x128xf32, #tpu.memory_space<vmem>>, %arg17: memref<16x128xf32, #tpu.memory_space<vmem>>, %arg18: memref<16x128xf32, #tpu.memory_space<vmem>>) attributes {dimension_semantics = [#tpu.dimension_semantics<parallel>, #tpu.dimension_semantics<arbitrary>], iteration_bounds = array<i64: 1, 1>, scalar_prefetch = 0 : i64, scratch_operands = 1 : i64, tpu.core_type = #tpu.core_type<tc>, window_params = [{transform_indices = @transform_0, window_bounds = array<i64: 16, 1024>}, {pipeline_mode = #tpu.pipeline_mode<synchronous>, transform_indices = @transform_1, window_bounds = array<i64: 1024, 128>}, {pipeline_mode = #tpu.pipeline_mode<synchronous>, transform_indices = @transform_2, window_bounds = array<i64: 1, 128>}, {pipeline_mode = #tpu.pipeline_mode<synchronous>, transform_indices = @transform_3, window_bounds = array<i64: 1, 128>}, {pipeline_mode = #tpu.pipeline_mode<synchronous>, transform_indices = @transform_4, window_bounds = array<i64: 1, 128>}, {pipeline_mode = #tpu.pipeline_mode<synchronous>, transform_indices = @transform_5, window_bounds = array<i64: 128, 128>}, {pipeline_mode = #tpu.pipeline_mode<synchronous>, transform_indices = @transform_6, window_bounds = array<i64: 1, 128>}, {pipeline_mode = #tpu.pipeline_mode<synchronous>, transform_indices = @transform_7, window_bounds = array<i64: 1, 128>}, {pipeline_mode = #tpu.pipeline_mode<synchronous>, transform_indices = @transform_8, window_bounds = array<i64: 1, 128>}, {pipeline_mode = #tpu.pipeline_mode<synchronous>, transform_indices = @transform_9, window_bounds = array<i64: 128, 128>}, {pipeline_mode = #tpu.pipeline_mode<synchronous>, transform_indices = @transform_10, window_bounds = array<i64: 1, 128>}, {pipeline_mode = #tpu.pipeline_mode<synchronous>, transform_indices = @transform_11, window_bounds = array<i64: 1, 128>}, {pipeline_mode = #tpu.pipeline_mode<synchronous>, transform_indices = @transform_12, window_bounds = array<i64: 1, 128>}, {pipeline_mode = #tpu.pipeline_mode<synchronous>, transform_indices = @transform_13, window_bounds = array<i64: 128, 128>}, {pipeline_mode = #tpu.pipeline_mode<synchronous>, transform_indices = @transform_14, window_bounds = array<i64: 1, 128>}, {transform_indices = @transform_15, window_bounds = array<i64: 16, 128>}]} {
    %c0_i32 = arith.constant 0 : i32
    %0 = arith.cmpi eq, %arg1, %c0_i32 : i32
    %1 = arith.extui %0 : i1 to i32
    %c0_i32_0 = arith.constant 0 : i32
    %2 = arith.cmpi ne, %1, %c0_i32_0 : i32
    scf.if %2 {
      %cst_10 = arith.constant 0.000000e+00 : f32
      %13 = vector.broadcast %cst_10 : f32 to vector<16x128xf32>
      %c0_11 = arith.constant 0 : index
      %c0_12 = arith.constant 0 : index
      %14 = vector.load %arg18[%c0_11, %c0_12] : memref<16x128xf32, #tpu.memory_space<vmem>>, vector<16x128xf32>
      tpu.vector_store %arg18[%c0_11, %c0_12], %13 {strides = array<i32>} : memref<16x128xf32, #tpu.memory_space<vmem>>, vector<16x128xf32>,
    } else {
    }
    %c0 = arith.constant 0 : index
    %c0_1 = arith.constant 0 : index
    %3 = vector.load %arg18[%c0, %c0_1] : memref<16x128xf32, #tpu.memory_space<vmem>>, vector<16x128xf32>
    %c0_2 = arith.constant 0 : index
    %c0_3 = arith.constant 0 : index
    %4 = vector.load %arg2[%c0_2, %c0_3] : memref<16x1024xf32, #tpu.memory_space<vmem>>, vector<16x1024xf32>
    %5 = arith.truncf %4 : vector<16x1024xf32> to vector<16x1024xbf16>
    %c0_4 = arith.constant 0 : index
    %c0_5 = arith.constant 0 : index
    %6 = vector.load %arg3[%c0_4, %c0_5] : memref<1024x128xbf16, #tpu.memory_space<vmem>>, vector<1024x128xbf16>
    %cst = arith.constant dense<0.000000e+00> : vector<16x128xf32>
    %7 = tpu.matmul %5, %6, %cst {dimension_numbers = #tpu.dot_dimension_numbers<[1], [0], [0], [1], [0, 0, 1, 1], [], []>} : vector<16x1024xbf16>, vector<1024x128xbf16>, vector<16x128xf32> -> vector<16x128xf32>
    %8 = arith.addf %3, %7 : vector<16x128xf32>
    %c0_6 = arith.constant 0 : index
    %c0_7 = arith.constant 0 : index
    %9 = vector.load %arg18[%c0_6, %c0_7] : memref<16x128xf32, #tpu.memory_space<vmem>>, vector<16x128xf32>
    tpu.vector_store %arg18[%c0_6, %c0_7], %8 {strides = array<i32>} : memref<16x128xf32, #tpu.memory_space<vmem>>, vector<16x128xf32>,
    %c0_i32_8 = arith.constant 0 : i32
    %10 = arith.cmpi eq, %arg1, %c0_i32_8 : i32
    %11 = arith.extui %10 : i1 to i32
    %c0_i32_9 = arith.constant 0 : i32
    %12 = arith.cmpi ne, %11, %c0_i32_9 : i32
    scf.if %12 {
      %c0_10 = arith.constant 0 : index
      %c0_11 = arith.constant 0 : index
      %13 = vector.load %arg18[%c0_10, %c0_11] : memref<16x128xf32, #tpu.memory_space<vmem>>, vector<16x128xf32>
      %c0_12 = arith.constant 0 : index
      %c0_13 = arith.constant 0 : index
      %14 = vector.load %arg4[%c0_12, %c0_13] : memref<1x128xf32, #tpu.memory_space<vmem>>, vector<1x128xf32>
      %15 = vector.broadcast %14 : vector<1x128xf32> to vector<16x128xf32>
      %16 = arith.addf %13, %15 : vector<16x128xf32>
      %cst_14 = arith.constant dense<0.000000e+00> : vector<16xf32>
      %17 = vector.multi_reduction <add>, %16, %cst_14 [1] : vector<16x128xf32> to vector<16xf32>
      %18 = vector.shape_cast %17 : vector<16xf32> to vector<16x1xf32>
      %19 = arith.mulf %16, %16 : vector<16x128xf32>
      %cst_15 = arith.constant dense<0.000000e+00> : vector<16xf32>
      %20 = vector.multi_reduction <add>, %19, %cst_15 [1] : vector<16x128xf32> to vector<16xf32>
      %21 = vector.shape_cast %20 : vector<16xf32> to vector<16x1xf32>
      %cst_16 = arith.constant 3.125000e-02 : f32
      %22 = vector.broadcast %cst_16 : f32 to vector<16x1xf32>
      %23 = arith.mulf %18, %22 : vector<16x1xf32>
      %cst_17 = arith.constant 3.125000e-02 : f32
      %24 = vector.broadcast %cst_17 : f32 to vector<16x1xf32>
      %25 = arith.mulf %21, %24 : vector<16x1xf32>
      %26 = arith.mulf %23, %23 : vector<16x1xf32>
      %27 = arith.subf %25, %26 : vector<16x1xf32>
      %cst_18 = arith.constant 0.000000e+00 : f32
      %28 = vector.broadcast %cst_18 : f32 to vector<16x1xf32>
      %29 = arith.maximumf %27, %28 : vector<16x1xf32>
      %cst_19 = arith.constant 9.99999974E-6 : f32
      %30 = vector.broadcast %cst_19 : f32 to vector<16x1xf32>
      %31 = arith.addf %29, %30 : vector<16x1xf32>
      %32 = math.rsqrt %31 : vector<16x1xf32>
      %33 = vector.broadcast %23 : vector<16x1xf32> to vector<16x128xf32>
      %34 = arith.subf %16, %33 : vector<16x128xf32>
      %35 = vector.broadcast %32 : vector<16x1xf32> to vector<16x128xf32>
      %36 = arith.mulf %34, %35 : vector<16x128xf32>
      %37 = arith.truncf %36 : vector<16x128xf32> to vector<16x128xbf16>
      %c0_20 = arith.constant 0 : index
      %c0_21 = arith.constant 0 : index
      %38 = vector.load %arg5[%c0_20, %c0_21] : memref<1x128xf32, #tpu.memory_space<vmem>>, vector<1x128xf32>
      %39 = arith.truncf %38 : vector<1x128xf32> to vector<1x128xbf16>
      %40 = vector.broadcast %39 : vector<1x128xbf16> to vector<16x128xbf16>
      %41 = arith.mulf %37, %40 : vector<16x128xbf16>
      %c0_22 = arith.constant 0 : index
      %c0_23 = arith.constant 0 : index
      %42 = vector.load %arg6[%c0_22, %c0_23] : memref<1x128xf32, #tpu.memory_space<vmem>>, vector<1x128xf32>
      %43 = arith.truncf %42 : vector<1x128xf32> to vector<1x128xbf16>
      %44 = vector.broadcast %43 : vector<1x128xbf16> to vector<16x128xbf16>
      %45 = arith.addf %41, %44 : vector<16x128xbf16>
      %cst_24 = arith.constant 0.000000e+00 : bf16
      %46 = vector.broadcast %cst_24 : bf16 to vector<16x128xbf16>
      %47 = arith.maximumf %45, %46 : vector<16x128xbf16>
      %c0_25 = arith.constant 0 : index
      %c0_26 = arith.constant 0 : index
      %48 = vector.load %arg7[%c0_25, %c0_26] : memref<128x128xbf16, #tpu.memory_space<vmem>>, vector<128x128xbf16>
      %cst_27 = arith.constant dense<0.000000e+00> : vector<16x128xf32>
      %49 = tpu.matmul %47, %48, %cst_27 {dimension_numbers = #tpu.dot_dimension_numbers<[1], [0], [0], [1], [0, 0, 1, 1], [], []>} : vector<16x128xbf16>, vector<128x128xbf16>, vector<16x128xf32> -> vector<16x128xf32>
      %c0_28 = arith.constant 0 : index
      %c0_29 = arith.constant 0 : index
      %50 = vector.load %arg8[%c0_28, %c0_29] : memref<1x128xf32, #tpu.memory_space<vmem>>, vector<1x128xf32>
      %51 = vector.broadcast %50 : vector<1x128xf32> to vector<16x128xf32>
      %52 = arith.addf %49, %51 : vector<16x128xf32>
      %cst_30 = arith.constant dense<0.000000e+00> : vector<16xf32>
      %53 = vector.multi_reduction <add>, %52, %cst_30 [1] : vector<16x128xf32> to vector<16xf32>
      %54 = vector.shape_cast %53 : vector<16xf32> to vector<16x1xf32>
      %55 = arith.mulf %52, %52 : vector<16x128xf32>
      %cst_31 = arith.constant dense<0.000000e+00> : vector<16xf32>
      %56 = vector.multi_reduction <add>, %55, %cst_31 [1] : vector<16x128xf32> to vector<16xf32>
      %57 = vector.shape_cast %56 : vector<16xf32> to vector<16x1xf32>
      %cst_32 = arith.constant 3.125000e-02 : f32
      %58 = vector.broadcast %cst_32 : f32 to vector<16x1xf32>
      %59 = arith.mulf %54, %58 : vector<16x1xf32>
      %cst_33 = arith.constant 3.125000e-02 : f32
      %60 = vector.broadcast %cst_33 : f32 to vector<16x1xf32>
      %61 = arith.mulf %57, %60 : vector<16x1xf32>
      %62 = arith.mulf %59, %59 : vector<16x1xf32>
      %63 = arith.subf %61, %62 : vector<16x1xf32>
      %cst_34 = arith.constant 0.000000e+00 : f32
      %64 = vector.broadcast %cst_34 : f32 to vector<16x1xf32>
      %65 = arith.maximumf %63, %64 : vector<16x1xf32>
      %cst_35 = arith.constant 9.99999974E-6 : f32
      %66 = vector.broadcast %cst_35 : f32 to vector<16x1xf32>
      %67 = arith.addf %65, %66 : vector<16x1xf32>
      %68 = math.rsqrt %67 : vector<16x1xf32>
      %69 = vector.broadcast %59 : vector<16x1xf32> to vector<16x128xf32>
      %70 = arith.subf %52, %69 : vector<16x128xf32>
      %71 = vector.broadcast %68 : vector<16x1xf32> to vector<16x128xf32>
      %72 = arith.mulf %70, %71 : vector<16x128xf32>
      %73 = arith.truncf %72 : vector<16x128xf32> to vector<16x128xbf16>
      %c0_36 = arith.constant 0 : index
      %c0_37 = arith.constant 0 : index
      %74 = vector.load %arg9[%c0_36, %c0_37] : memref<1x128xf32, #tpu.memory_space<vmem>>, vector<1x128xf32>
      %75 = arith.truncf %74 : vector<1x128xf32> to vector<1x128xbf16>
      %76 = vector.broadcast %75 : vector<1x128xbf16> to vector<16x128xbf16>
      %77 = arith.mulf %73, %76 : vector<16x128xbf16>
      %c0_38 = arith.constant 0 : index
      %c0_39 = arith.constant 0 : index
      %78 = vector.load %arg10[%c0_38, %c0_39] : memref<1x128xf32, #tpu.memory_space<vmem>>, vector<1x128xf32>
      %79 = arith.truncf %78 : vector<1x128xf32> to vector<1x128xbf16>
      %80 = vector.broadcast %79 : vector<1x128xbf16> to vector<16x128xbf16>
      %81 = arith.addf %77, %80 : vector<16x128xbf16>
      %cst_40 = arith.constant 0.000000e+00 : bf16
      %82 = vector.broadcast %cst_40 : bf16 to vector<16x128xbf16>
      %83 = arith.maximumf %81, %82 : vector<16x128xbf16>
      %c0_41 = arith.constant 0 : index
      %c0_42 = arith.constant 0 : index
      %84 = vector.load %arg11[%c0_41, %c0_42] : memref<128x128xbf16, #tpu.memory_space<vmem>>, vector<128x128xbf16>
      %cst_43 = arith.constant dense<0.000000e+00> : vector<16x128xf32>
      %85 = tpu.matmul %83, %84, %cst_43 {dimension_numbers = #tpu.dot_dimension_numbers<[1], [0], [0], [1], [0, 0, 1, 1], [], []>} : vector<16x128xbf16>, vector<128x128xbf16>, vector<16x128xf32> -> vector<16x128xf32>
      %c0_44 = arith.constant 0 : index
      %c0_45 = arith.constant 0 : index
      %86 = vector.load %arg12[%c0_44, %c0_45] : memref<1x128xf32, #tpu.memory_space<vmem>>, vector<1x128xf32>
      %87 = vector.broadcast %86 : vector<1x128xf32> to vector<16x128xf32>
      %88 = arith.addf %85, %87 : vector<16x128xf32>
      %cst_46 = arith.constant dense<0.000000e+00> : vector<16xf32>
      %89 = vector.multi_reduction <add>, %88, %cst_46 [1] : vector<16x128xf32> to vector<16xf32>
      %90 = vector.shape_cast %89 : vector<16xf32> to vector<16x1xf32>
      %91 = arith.mulf %88, %88 : vector<16x128xf32>
      %cst_47 = arith.constant dense<0.000000e+00> : vector<16xf32>
      %92 = vector.multi_reduction <add>, %91, %cst_47 [1] : vector<16x128xf32> to vector<16xf32>
      %93 = vector.shape_cast %92 : vector<16xf32> to vector<16x1xf32>
      %cst_48 = arith.constant 3.125000e-02 : f32
      %94 = vector.broadcast %cst_48 : f32 to vector<16x1xf32>
      %95 = arith.mulf %90, %94 : vector<16x1xf32>
      %cst_49 = arith.constant 3.125000e-02 : f32
      %96 = vector.broadcast %cst_49 : f32 to vector<16x1xf32>
      %97 = arith.mulf %93, %96 : vector<16x1xf32>
      %98 = arith.mulf %95, %95 : vector<16x1xf32>
      %99 = arith.subf %97, %98 : vector<16x1xf32>
      %cst_50 = arith.constant 0.000000e+00 : f32
      %100 = vector.broadcast %cst_50 : f32 to vector<16x1xf32>
      %101 = arith.maximumf %99, %100 : vector<16x1xf32>
      %cst_51 = arith.constant 9.99999974E-6 : f32
      %102 = vector.broadcast %cst_51 : f32 to vector<16x1xf32>
      %103 = arith.addf %101, %102 : vector<16x1xf32>
      %104 = math.rsqrt %103 : vector<16x1xf32>
      %105 = vector.broadcast %95 : vector<16x1xf32> to vector<16x128xf32>
      %106 = arith.subf %88, %105 : vector<16x128xf32>
      %107 = vector.broadcast %104 : vector<16x1xf32> to vector<16x128xf32>
      %108 = arith.mulf %106, %107 : vector<16x128xf32>
      %109 = arith.truncf %108 : vector<16x128xf32> to vector<16x128xbf16>
      %c0_52 = arith.constant 0 : index
      %c0_53 = arith.constant 0 : index
      %110 = vector.load %arg13[%c0_52, %c0_53] : memref<1x128xf32, #tpu.memory_space<vmem>>, vector<1x128xf32>
      %111 = arith.truncf %110 : vector<1x128xf32> to vector<1x128xbf16>
      %112 = vector.broadcast %111 : vector<1x128xbf16> to vector<16x128xbf16>
      %113 = arith.mulf %109, %112 : vector<16x128xbf16>
      %c0_54 = arith.constant 0 : index
      %c0_55 = arith.constant 0 : index
      %114 = vector.load %arg14[%c0_54, %c0_55] : memref<1x128xf32, #tpu.memory_space<vmem>>, vector<1x128xf32>
      %115 = arith.truncf %114 : vector<1x128xf32> to vector<1x128xbf16>
      %116 = vector.broadcast %115 : vector<1x128xbf16> to vector<16x128xbf16>
      %117 = arith.addf %113, %116 : vector<16x128xbf16>
      %cst_56 = arith.constant 0.000000e+00 : bf16
      %118 = vector.broadcast %cst_56 : bf16 to vector<16x128xbf16>
      %119 = arith.maximumf %117, %118 : vector<16x128xbf16>
      %c0_57 = arith.constant 0 : index
      %c0_58 = arith.constant 0 : index
      %120 = vector.load %arg15[%c0_57, %c0_58] : memref<128x128xbf16, #tpu.memory_space<vmem>>, vector<128x128xbf16>
      %cst_59 = arith.constant dense<0.000000e+00> : vector<16x128xf32>
      %121 = tpu.matmul %119, %120, %cst_59 {dimension_numbers = #tpu.dot_dimension_numbers<[1], [0], [0], [1], [0, 0, 1, 1], [], []>} : vector<16x128xbf16>, vector<128x128xbf16>, vector<16x128xf32> -> vector<16x128xf32>
      %c0_60 = arith.constant 0 : index
      %c0_61 = arith.constant 0 : index
      %122 = vector.load %arg16[%c0_60, %c0_61] : memref<1x128xf32, #tpu.memory_space<vmem>>, vector<1x128xf32>
      %123 = vector.broadcast %122 : vector<1x128xf32> to vector<16x128xf32>
      %124 = arith.addf %121, %123 : vector<16x128xf32>
      %c0_62 = arith.constant 0 : index
      %c0_63 = arith.constant 0 : index
      %125 = vector.load %arg17[%c0_62, %c0_63] : memref<16x128xf32, #tpu.memory_space<vmem>>, vector<16x128xf32>
      tpu.vector_store %arg17[%c0_62, %c0_63], %124 {strides = array<i32>} : memref<16x128xf32, #tpu.memory_space<vmem>>, vector<16x128xf32>,
    } else {
    }
    return
  }
  func.func @transform_0(%arg0: i32, %arg1: i32) -> (i32, i32) {
    %c0_i32 = arith.constant 0 : i32
    return %arg0, %arg1 : i32, i32
  }
  func.func @transform_1(%arg0: i32, %arg1: i32) -> (i32, i32) {
    %c0_i32 = arith.constant 0 : i32
    %c0_i32_0 = arith.constant 0 : i32
    return %arg1, %c0_i32 : i32, i32
  }
  func.func @transform_2(%arg0: i32, %arg1: i32) -> (i32, i32) {
    %c0_i32 = arith.constant 0 : i32
    %c0_i32_0 = arith.constant 0 : i32
    %c0_i32_1 = arith.constant 0 : i32
    return %c0_i32, %c0_i32_0 : i32, i32
  }
  func.func @transform_3(%arg0: i32, %arg1: i32) -> (i32, i32) {
    %c0_i32 = arith.constant 0 : i32
    %c0_i32_0 = arith.constant 0 : i32
    %c0_i32_1 = arith.constant 0 : i32
    return %c0_i32, %c0_i32_0 : i32, i32
  }
  func.func @transform_4(%arg0: i32, %arg1: i32) -> (i32, i32) {
    %c0_i32 = arith.constant 0 : i32
    %c0_i32_0 = arith.constant 0 : i32
    %c0_i32_1 = arith.constant 0 : i32
    return %c0_i32, %c0_i32_0 : i32, i32
  }
  func.func @transform_5(%arg0: i32, %arg1: i32) -> (i32, i32) {
    %c0_i32 = arith.constant 0 : i32
    %c0_i32_0 = arith.constant 0 : i32
    %c0_i32_1 = arith.constant 0 : i32
    return %c0_i32, %c0_i32_0 : i32, i32
  }
  func.func @transform_6(%arg0: i32, %arg1: i32) -> (i32, i32) {
    %c0_i32 = arith.constant 0 : i32
    %c0_i32_0 = arith.constant 0 : i32
    %c0_i32_1 = arith.constant 0 : i32
    return %c0_i32, %c0_i32_0 : i32, i32
  }
  func.func @transform_7(%arg0: i32, %arg1: i32) -> (i32, i32) {
    %c0_i32 = arith.constant 0 : i32
    %c0_i32_0 = arith.constant 0 : i32
    %c0_i32_1 = arith.constant 0 : i32
    return %c0_i32, %c0_i32_0 : i32, i32
  }
  func.func @transform_8(%arg0: i32, %arg1: i32) -> (i32, i32) {
    %c0_i32 = arith.constant 0 : i32
    %c0_i32_0 = arith.constant 0 : i32
    %c0_i32_1 = arith.constant 0 : i32
    return %c0_i32, %c0_i32_0 : i32, i32
  }
  func.func @transform_9(%arg0: i32, %arg1: i32) -> (i32, i32) {
    %c0_i32 = arith.constant 0 : i32
    %c0_i32_0 = arith.constant 0 : i32
    %c0_i32_1 = arith.constant 0 : i32
    return %c0_i32, %c0_i32_0 : i32, i32
  }
  func.func @transform_10(%arg0: i32, %arg1: i32) -> (i32, i32) {
    %c0_i32 = arith.constant 0 : i32
    %c0_i32_0 = arith.constant 0 : i32
    %c0_i32_1 = arith.constant 0 : i32
    return %c0_i32, %c0_i32_0 : i32, i32
  }
  func.func @transform_11(%arg0: i32, %arg1: i32) -> (i32, i32) {
    %c0_i32 = arith.constant 0 : i32
    %c0_i32_0 = arith.constant 0 : i32
    %c0_i32_1 = arith.constant 0 : i32
    return %c0_i32, %c0_i32_0 : i32, i32
  }
  func.func @transform_12(%arg0: i32, %arg1: i32) -> (i32, i32) {
    %c0_i32 = arith.constant 0 : i32
    %c0_i32_0 = arith.constant 0 : i32
    %c0_i32_1 = arith.constant 0 : i32
    return %c0_i32, %c0_i32_0 : i32, i32
  }
  func.func @transform_13(%arg0: i32, %arg1: i32) -> (i32, i32) {
    %c0_i32 = arith.constant 0 : i32
    %c0_i32_0 = arith.constant 0 : i32
    %c0_i32_1 = arith.constant 0 : i32
    return %c0_i32, %c0_i32_0 : i32, i32
  }
  func.func @transform_14(%arg0: i32, %arg1: i32) -> (i32, i32) {
    %c0_i32 = arith.constant 0 : i32
    %c0_i32_0 = arith.constant 0 : i32
    %c0_i32_1 = arith.constant 0 : i32
    return %c0_i32, %c0_i32_0 : i32, i32
  }
  func.func @transform_15(%arg0: i32, %arg1: i32) -> (i32, i32) {
    %c0_i32 = arith.constant 0 : i32
    %c0_i32_0 = arith.constant 0 : i32
    return %arg0, %c0_i32 : i32, i32
  }
}

</mosaic_0001>

<llo_original>
// kernel: tpu_custom_call.1
$region0: #{tpu_custom_call.1}
  #allocation0 [shape = 'u32[]', space=smem, size = 0x4, offset = 0x4, fixed_abs, tag = 'smem constant byte address 0x4 - core index']
  #allocation1 [shape = 'u32[72,128]{1,0:T(1,128)}', space=vmem, size = 0x9000, scoped, tag = 'internal scratch']
  #allocation2 [shape = 'f32[16,128]{1,0:T(8,128)}', space=vmem, size = 0x2000, scoped, tag = 'scratch operand']
  %s0 = inlined_call_operand.hbm [shape: f32[16,1024], index: 0, kind: input, shape index: {}]
  %s1 = inlined_call_operand.hbm [shape: bf16[1024,128], index: 1, kind: input, shape index: {}]
  %s2 = inlined_call_operand.vmem [shape: f32[1,128], index: 2, kind: input, shape index: {}]
  %s3 = inlined_call_operand.vmem [shape: f32[1,128], index: 3, kind: input, shape index: {}]
  %s4 = inlined_call_operand.vmem [shape: f32[1,128], index: 4, kind: input, shape index: {}]
  %s5 = inlined_call_operand.hbm [shape: bf16[128,128], index: 5, kind: input, shape index: {}]
  %s6 = inlined_call_operand.vmem [shape: f32[1,128], index: 6, kind: input, shape index: {}]
  %s7 = inlined_call_operand.vmem [shape: f32[1,128], index: 7, kind: input, shape index: {}]
  %s8 = inlined_call_operand.vmem [shape: f32[1,128], index: 8, kind: input, shape index: {}]
  %s9 = inlined_call_operand.hbm [shape: bf16[128,128], index: 9, kind: input, shape index: {}]
  %s10 = inlined_call_operand.vmem [shape: f32[1,128], index: 10, kind: input, shape index: {}]
  %s11 = inlined_call_operand.vmem [shape: f32[1,128], index: 11, kind: input, shape index: {}]
  %s12 = inlined_call_operand.vmem [shape: f32[1,128], index: 12, kind: input, shape index: {}]
  %s13 = inlined_call_operand.hbm [shape: bf16[128,128], index: 13, kind: input, shape index: {}]
  %s14 = inlined_call_operand.vmem [shape: f32[1,128], index: 14, kind: input, shape index: {}]
  %s15 = inlined_call_operand.hbm [shape: f32[16,128], index: 15, kind: output, shape index: {}]
  %s16 = sld [smem:[#allocation0]]
  $region98: #{tpu_custom_call.1} parent=0
    _
  %s18 = ssub.s32 1, %s16
  %s19 = scalar_select 0, %s18, %s16
  $region1: #{tpu_custom_call.1} parent=0
    #allocation3 [shape = 'u8[65536]{0}', space=vmem, size = 0x10000, scoped, tag = 'input window, operand 0, single buffered']
    #allocation4 [shape = 's32[1]{0}', space=sflag, size = 0x4, scoped, tag = 'scoped memory for tpu_custom_call.1']
    #allocation5 [shape = 's32[1]{0}', space=sflag, size = 0x4, scoped, tag = 'scoped memory for tpu_custom_call.1']
    #allocation6 [shape = 'u8[262144]{0}', space=vmem, size = 0x40000, scoped, tag = 'input window, operand 1, single buffered']
    #allocation7 [shape = 's32[1]{0}', space=sflag, size = 0x4, scoped, tag = 'scoped memory for tpu_custom_call.1']
    #allocation8 [shape = 'u8[32768]{0}', space=vmem, size = 0x8000, scoped, tag = 'input window, operand 5, single buffered']
    #allocation9 [shape = 'u8[32768]{0}', space=vmem, size = 0x8000, scoped, tag = 'input window, operand 9, single buffered']
    #allocation10 [shape = 's32[1]{0}', space=sflag, size = 0x4, scoped, tag = 'scoped memory for tpu_custom_call.1']
    #allocation11 [shape = 'u8[32768]{0}', space=vmem, size = 0x8000, scoped, tag = 'input window, operand 13, single buffered']
    #allocation12 [shape = 'u8[8192]{0}', space=vmem, size = 0x2000, scoped, tag = 'output window, operand 0, single buffered']
    %20 = vsyncpa [#allocation4], 0
    %21 = vsyncpa [#allocation7], 0
    %22 = vsyncpa [#allocation10], 0
    %23 = vsyncpa [#allocation5], 0
    // Predicated region
    $region2: #{tpu_custom_call.1} parent=1 // pred_check
      _
    $region3: #{tpu_custom_call.1} parent=1 // pred_check_branch
      %25 = sbr.rel (0) target = $region5
    $region4: #{tpu_custom_call.1} parent=1 // pred_region
      %27 = vsyncadd [#allocation4], 0
      %s28 = sshll.u32 %s0, 4
      %s29 = int_to_ptr.hbm [resolvable:$true] %s28
      %s30 = sshll.u32 [#allocation3], 4
      %s31 = int_to_ptr.vmem [resolvable:$true] %s30
      %36 = dma.hbm_to_vmem [thread:$0]  %s29, 2048, %s31, [#allocation4], 1024, 1024, 64
    $region5: #{tpu_custom_call.1} parent=1 // pred_fallthru
      _
    // Predicated region
    $region6: #{tpu_custom_call.1} parent=1 // pred_check
      _
    $region7: #{tpu_custom_call.1} parent=1 // pred_check_branch
      %38 = sbr.rel (0) target = $region9
    $region8: #{tpu_custom_call.1} parent=1 // pred_region
      %40 = vsyncadd [#allocation7], 0
      %s41 = sshll.u32 %s1, 4
      %s42 = int_to_ptr.hbm [resolvable:$true] %s41
      %s43 = sshll.u32 [#allocation6], 4
      %s44 = int_to_ptr.vmem [resolvable:$true] %s43
      %49 = dma.hbm_to_vmem [thread:$0]  %s42, 8192, %s44, [#allocation7], 64, 64, 4
    $region9: #{tpu_custom_call.1} parent=1 // pred_fallthru
      _
    // Predicated region
    $region10: #{tpu_custom_call.1} parent=1 // pred_check
      _
    $region11: #{tpu_custom_call.1} parent=1 // pred_check_branch
      %51 = sbr.rel (0) target = $region13
    $region12: #{tpu_custom_call.1} parent=1 // pred_region
      _
    $region13: #{tpu_custom_call.1} parent=1 // pred_fallthru
      _
    // Predicated region
    $region14: #{tpu_custom_call.1} parent=1 // pred_check
      _
    $region15: #{tpu_custom_call.1} parent=1 // pred_check_branch
      %53 = sbr.rel (0) target = $region17
    $region16: #{tpu_custom_call.1} parent=1 // pred_region
      _
    $region17: #{tpu_custom_call.1} parent=1 // pred_fallthru
      _
    // Predicated region
    $region18: #{tpu_custom_call.1} parent=1 // pred_check
      _
    $region19: #{tpu_custom_call.1} parent=1 // pred_check_branch
      %55 = sbr.rel (0) target = $region21
    $region20: #{tpu_custom_call.1} parent=1 // pred_region
      _
    $region21: #{tpu_custom_call.1} parent=1 // pred_fallthru
      _
    // Predicated region
    $region22: #{tpu_custom_call.1} parent=1 // pred_check
      _
    $region23: #{tpu_custom_call.1} parent=1 // pred_check_branch
      %57 = sbr.rel (0) target = $region25
    $region24: #{tpu_custom_call.1} parent=1 // pred_region
      %59 = vsyncadd [#allocation7], 0
      %s60 = sshll.u32 %s5, 4
      %s61 = int_to_ptr.hbm [resolvable:$true] %s60
      %s62 = sshll.u32 [#allocation8], 4
      %s63 = int_to_ptr.vmem [resolvable:$true] %s62
      %68 = dma.hbm_to_vmem [thread:$0]  %s61, 1024, %s63, [#allocation7], 64, 64, 4
    $region25: #{tpu_custom_call.1} parent=1 // pred_fallthru
      _
    // Predicated region
    $region26: #{tpu_custom_call.1} parent=1 // pred_check
      _
    $region27: #{tpu_custom_call.1} parent=1 // pred_check_branch
      %70 = sbr.rel (0) target = $region29
    $region28: #{tpu_custom_call.1} parent=1 // pred_region
      _
    $region29: #{tpu_custom_call.1} parent=1 // pred_fallthru
      _
    // Predicated region
    $region30: #{tpu_custom_call.1} parent=1 // pred_check
      _
    $region31: #{tpu_custom_call.1} parent=1 // pred_check_branch
      %72 = sbr.rel (0) target = $region33
    $region32: #{tpu_custom_call.1} parent=1 // pred_region
      _
    $region33: #{tpu_custom_call.1} parent=1 // pred_fallthru
      _
    // Predicated region
    $region34: #{tpu_custom_call.1} parent=1 // pred_check
      _
    $region35: #{tpu_custom_call.1} parent=1 // pred_check_branch
      %74 = sbr.rel (0) target = $region37
    $region36: #{tpu_custom_call.1} parent=1 // pred_region
      _
    $region37: #{tpu_custom_call.1} parent=1 // pred_fallthru
      _
    // Predicated region
    $region38: #{tpu_custom_call.1} parent=1 // pred_check
      _
    $region39: #{tpu_custom_call.1} parent=1 // pred_check_branch
      %76 = sbr.rel (0) target = $region41
    $region40: #{tpu_custom_call.1} parent=1 // pred_region
      %78 = vsyncadd [#allocation10], 0
      %s79 = sshll.u32 %s9, 4
      %s80 = int_to_ptr.hbm [resolvable:$true] %s79
      %s81 = sshll.u32 [#allocation9], 4
      %s82 = int_to_ptr.vmem [resolvable:$true] %s81
      %87 = dma.hbm_to_vmem [thread:$0]  %s80, 1024, %s82, [#allocation10], 64, 64, 4
    $region41: #{tpu_custom_call.1} parent=1 // pred_fallthru
      _
    // Predicated region
    $region42: #{tpu_custom_call.1} parent=1 // pred_check
      _
    $region43: #{tpu_custom_call.1} parent=1 // pred_check_branch
      %89 = sbr.rel (0) target = $region45
    $region44: #{tpu_custom_call.1} parent=1 // pred_region
      _
    $region45: #{tpu_custom_call.1} parent=1 // pred_fallthru
      _
    // Predicated region
    $region46: #{tpu_custom_call.1} parent=1 // pred_check
      _
    $region47: #{tpu_custom_call.1} parent=1 // pred_check_branch
      %91 = sbr.rel (0) target = $region49
    $region48: #{tpu_custom_call.1} parent=1 // pred_region
      _
    $region49: #{tpu_custom_call.1} parent=1 // pred_fallthru
      _
    // Predicated region
    $region50: #{tpu_custom_call.1} parent=1 // pred_check
      _
    $region51: #{tpu_custom_call.1} parent=1 // pred_check_branch
      %93 = sbr.rel (0) target = $region53
    $region52: #{tpu_custom_call.1} parent=1 // pred_region
      _
    $region53: #{tpu_custom_call.1} parent=1 // pred_fallthru
      _
    // Predicated region
    $region54: #{tpu_custom_call.1} parent=1 // pred_check
      _
    $region55: #{tpu_custom_call.1} parent=1 // pred_check_branch
      %95 = sbr.rel (0) target = $region57
    $region56: #{tpu_custom_call.1} parent=1 // pred_region
      %97 = vsyncadd [#allocation10], 0
      %s98 = sshll.u32 %s13, 4
      %s99 = int_to_ptr.hbm [resolvable:$true] %s98
      %s100 = sshll.u32 [#allocation11], 4
      %s101 = int_to_ptr.vmem [resolvable:$true] %s100
      %106 = dma.hbm_to_vmem [thread:$0]  %s99, 1024, %s101, [#allocation10], 64, 64, 4
    $region57: #{tpu_custom_call.1} parent=1 // pred_fallthru
      _
    // Predicated region
    $region58: #{tpu_custom_call.1} parent=1 // pred_check
      _
    $region59: #{tpu_custom_call.1} parent=1 // pred_check_branch
      %108 = sbr.rel (0) target = $region61
    $region60: #{tpu_custom_call.1} parent=1 // pred_region
      _
    $region61: #{tpu_custom_call.1} parent=1 // pred_fallthru
      _
    // Predicated region
    $region62: #{tpu_custom_call.1} parent=1 // pred_check
      _
    $region63: #{tpu_custom_call.1} parent=1 // pred_check_branch
      %110 = sbr.rel (0) target = $region65
    $region64: #{tpu_custom_call.1} parent=1 // pred_region
      %112 = dma.done [#allocation4], 2048
    $region65: #{tpu_custom_call.1} parent=1 // pred_fallthru
      _
    // Predicated region
    $region66: #{tpu_custom_call.1} parent=1 // pred_check
      _
    $region67: #{tpu_custom_call.1} parent=1 // pred_check_branch
      %114 = sbr.rel (0) target = $region69
    $region68: #{tpu_custom_call.1} parent=1 // pred_region
      %116 = dma.done [#allocation7], 8192
    $region69: #{tpu_custom_call.1} parent=1 // pred_fallthru
      _
    // Predicated region
    $region70: #{tpu_custom_call.1} parent=1 // pred_check
      _
    $region71: #{tpu_custom_call.1} parent=1 // pred_check_branch
      %118 = sbr.rel (0) target = $region73
    $region72: #{tpu_custom_call.1} parent=1 // pred_region
      %120 = dma.done [#allocation7], 1024
    $region73: #{tpu_custom_call.1} parent=1 // pred_fallthru
      _
    // Predicated region
    $region74: #{tpu_custom_call.1} parent=1 // pred_check
      _
    $region75: #{tpu_custom_call.1} parent=1 // pred_check_branch
      %122 = sbr.rel (0) target = $region77
    $region76: #{tpu_custom_call.1} parent=1 // pred_region
      %124 = dma.done [#allocation10], 1024
    $region77: #{tpu_custom_call.1} parent=1 // pred_fallthru
      _
    // Predicated region
    $region78: #{tpu_custom_call.1} parent=1 // pred_check
      _
    $region79: #{tpu_custom_call.1} parent=1 // pred_check_branch
      %126 = sbr.rel (0) target = $region81
    $region80: #{tpu_custom_call.1} parent=1 // pred_region
      %128 = dma.done [#allocation10], 1024
    $region81: #{tpu_custom_call.1} parent=1 // pred_fallthru
      _
    %p129 = scmp.eq.s32.totalorder 0, 0
    // Predicated region
    $region82: #{tpu_custom_call.1} parent=1 // pred_check
      %p130 = pneg %p129
    $region83: #{tpu_custom_call.1} parent=1 // pred_check_branch
      %132 = sbr.rel (%p130) target = $region85
    $region84: #{tpu_custom_call.1} parent=1 // pred_region
      %133 = vst [vmem:[#allocation2] sm:$0xff] 0.0
      %134 = vst [vmem:[#allocation2 + $0x8] sm:$0xff] 0.0
    $region85: #{tpu_custom_call.1} parent=1 // pred_fallthru
      _
    %v135 = vld [vmem:[#allocation2] sm:$0xff]
    %v136 = vld [vmem:[#allocation2 + $0x8] sm:$0xff]
    %v137 = vld [vmem:[#allocation3] sm:$0xff]
    %v138 = vld [vmem:[#allocation3 + $0x8] sm:$0xff]
    %v139 = vld [vmem:[#allocation3 + $0x10] sm:$0xff]
    %v140 = vld [vmem:[#allocation3 + $0x18] sm:$0xff]
    %v141 = vld [vmem:[#allocation3 + $0x20] sm:$0xff]
    %v142 = vld [vmem:[#allocation3 + $0x28] sm:$0xff]
    %v143 = vld [vmem:[#allocation3 + $0x30] sm:$0xff]
    %v144 = vld [vmem:[#allocation3 + $0x38] sm:$0xff]
    %v145 = vld [vmem:[#allocation3 + $0x40] sm:$0xff]
    %v146 = vld [vmem:[#allocation3 + $0x48] sm:$0xff]
    %v147 = vld [vmem:[#allocation3 + $0x50] sm:$0xff]
    %v148 = vld [vmem:[#allocation3 + $0x58] sm:$0xff]
    %v149 = vld [vmem:[#allocation3 + $0x60] sm:$0xff]
    %v150 = vld [vmem:[#allocation3 + $0x68] sm:$0xff]
    %v151 = vld [vmem:[#allocation3 + $0x70] sm:$0xff]
    %v152 = vld [vmem:[#allocation3 + $0x78] sm:$0xff]
    %v153 = vpack.c.bf16 %v145, %v137
    %v154 = vpack.c.bf16 %v146, %v138
    %v155 = vpack.c.bf16 %v147, %v139
    %v156 = vpack.c.bf16 %v148, %v140
    %v157 = vpack.c.bf16 %v149, %v141
    %v158 = vpack.c.bf16 %v150, %v142
    %v159 = vpack.c.bf16 %v151, %v143
    %v160 = vpack.c.bf16 %v152, %v144
    %v161 = vld [vmem:[#allocation6] sm:$0xf]
    %v162 = vld [vmem:[#allocation6 + $0x4] sm:$0xf]
    %v163 = vld [vmem:[#allocation6 + $0x8] sm:$0xf]
    %v164 = vld [vmem:[#allocation6 + $0xc] sm:$0xf]
    %v165 = vld [vmem:[#allocation6 + $0x10] sm:$0xf]
    %v166 = vld [vmem:[#allocation6 + $0x14] sm:$0xf]
    %v167 = vld [vmem:[#allocation6 + $0x18] sm:$0xf]
    %v168 = vld [vmem:[#allocation6 + $0x1c] sm:$0xf]
    %v169 = vld [vmem:[#allocation6 + $0x20] sm:$0xf]
    %v170 = vld [vmem:[#allocation6 + $0x24] sm:$0xf]
    %v171 = vld [vmem:[#allocation6 + $0x28] sm:$0xf]
    %v172 = vld [vmem:[#allocation6 + $0x2c] sm:$0xf]
    %v173 = vld [vmem:[#allocation6 + $0x30] sm:$0xf]
    %v174 = vld [vmem:[#allocation6 + $0x34] sm:$0xf]
    %v175 = vld [vmem:[#allocation6 + $0x38] sm:$0xf]
    %v176 = vld [vmem:[#allocation6 + $0x3c] sm:$0xf]
    %v177 = vld [vmem:[#allocation6 + $0x40] sm:$0xf]
    %v178 = vld [vmem:[#allocation6 + $0x44] sm:$0xf]
    %v179 = vld [vmem:[#allocation6 + $0x48] sm:$0xf]
    %v180 = vld [vmem:[#allocation6 + $0x4c] sm:$0xf]
    %v181 = vld [vmem:[#allocation6 + $0x50] sm:$0xf]
    %v182 = vld [vmem:[#allocation6 + $0x54] sm:$0xf]
    %v183 = vld [vmem:[#allocation6 + $0x58] sm:$0xf]
    %v184 = vld [vmem:[#allocation6 + $0x5c] sm:$0xf]
    %v185 = vld [vmem:[#allocation6 + $0x60] sm:$0xf]
    %v186 = vld [vmem:[#allocation6 + $0x64] sm:$0xf]
    %v187 = vld [vmem:[#allocation6 + $0x68] sm:$0xf]
    %v188 = vld [vmem:[#allocation6 + $0x6c] sm:$0xf]
    %v189 = vld [vmem:[#allocation6 + $0x70] sm:$0xf]
    %v190 = vld [vmem:[#allocation6 + $0x74] sm:$0xf]
    %v191 = vld [vmem:[#allocation6 + $0x78] sm:$0xf]
    %v192 = vld [vmem:[#allocation6 + $0x7c] sm:$0xf]
    %v193 = vld [vmem:[#allocation6 + $0x80] sm:$0xf]
    %v194 = vld [vmem:[#allocation6 + $0x84] sm:$0xf]
    %v195 = vld [vmem:[#allocation6 + $0x88] sm:$0xf]
    %v196 = vld [vmem:[#allocation6 + $0x8c] sm:$0xf]
    %v197 = vld [vmem:[#allocation6 + $0x90] sm:$0xf]
    %v198 = vld [vmem:[#allocation6 + $0x94] sm:$0xf]
    %v199 = vld [vmem:[#allocation6 + $0x98] sm:$0xf]
    %v200 = vld [vmem:[#allocation6 + $0x9c] sm:$0xf]
    %v201 = vld [vmem:[#allocation6 + $0xa0] sm:$0xf]
    %v202 = vld [vmem:[#allocation6 + $0xa4] sm:$0xf]
    %v203 = vld [vmem:[#allocation6 + $0xa8] sm:$0xf]
    %v204 = vld [vmem:[#allocation6 + $0xac] sm:$0xf]
    %v205 = vld [vmem:[#allocation6 + $0xb0] sm:$0xf]
    %v206 = vld [vmem:[#allocation6 + $0xb4] sm:$0xf]
    %v207 = vld [vmem:[#allocation6 + $0xb8] sm:$0xf]
    %v208 = vld [vmem:[#allocation6 + $0xbc] sm:$0xf]
    %v209 = vld [vmem:[#allocation6 + $0xc0] sm:$0xf]
    %v210 = vld [vmem:[#allocation6 + $0xc4] sm:$0xf]
    %v211 = vld [vmem:[#allocation6 + $0xc8] sm:$0xf]
    %v212 = vld [vmem:[#allocation6 + $0xcc] sm:$0xf]
    %v213 = vld [vmem:[#allocation6 + $0xd0] sm:$0xf]
    %v214 = vld [vmem:[#allocation6 + $0xd4] sm:$0xf]
    %v215 = vld [vmem:[#allocation6 + $0xd8] sm:$0xf]
    %v216 = vld [vmem:[#allocation6 + $0xdc] sm:$0xf]
    %v217 = vld [vmem:[#allocation6 + $0xe0] sm:$0xf]
    %v218 = vld [vmem:[#allocation6 + $0xe4] sm:$0xf]
    %v219 = vld [vmem:[#allocation6 + $0xe8] sm:$0xf]
    %v220 = vld [vmem:[#allocation6 + $0xec] sm:$0xf]
    %v221 = vld [vmem:[#allocation6 + $0xf0] sm:$0xf]
    %v222 = vld [vmem:[#allocation6 + $0xf4] sm:$0xf]
    %v223 = vld [vmem:[#allocation6 + $0xf8] sm:$0xf]
    %v224 = vld [vmem:[#allocation6 + $0xfc] sm:$0xf]
    %v225 = vld [vmem:[#allocation6 + $0x100] sm:$0xf]
    %v226 = vld [vmem:[#allocation6 + $0x104] sm:$0xf]
    %v227 = vld [vmem:[#allocation6 + $0x108] sm:$0xf]
    %v228 = vld [vmem:[#allocation6 + $0x10c] sm:$0xf]
    %v229 = vld [vmem:[#allocation6 + $0x110] sm:$0xf]
    %v230 = vld [vmem:[#allocation6 + $0x114] sm:$0xf]
    %v231 = vld [vmem:[#allocation6 + $0x118] sm:$0xf]
    %v232 = vld [vmem:[#allocation6 + $0x11c] sm:$0xf]
    %v233 = vld [vmem:[#allocation6 + $0x120] sm:$0xf]
    %v234 = vld [vmem:[#allocation6 + $0x124] sm:$0xf]
    %v235 = vld [vmem:[#allocation6 + $0x128] sm:$0xf]
    %v236 = vld [vmem:[#allocation6 + $0x12c] sm:$0xf]
    %v237 = vld [vmem:[#allocation6 + $0x130] sm:$0xf]
    %v238 = vld [vmem:[#allocation6 + $0x134] sm:$0xf]
    %v239 = vld [vmem:[#allocation6 + $0x138] sm:$0xf]
    %v240 = vld [vmem:[#allocation6 + $0x13c] sm:$0xf]
    %v241 = vld [vmem:[#allocation6 + $0x140] sm:$0xf]
    %v242 = vld [vmem:[#allocation6 + $0x144] sm:$0xf]
    %v243 = vld [vmem:[#allocation6 + $0x148] sm:$0xf]
    %v244 = vld [vmem:[#allocation6 + $0x14c] sm:$0xf]
    %v245 = vld [vmem:[#allocation6 + $0x150] sm:$0xf]
    %v246 = vld [vmem:[#allocation6 + $0x154] sm:$0xf]
    %v247 = vld [vmem:[#allocation6 + $0x158] sm:$0xf]
    %v248 = vld [vmem:[#allocation6 + $0x15c] sm:$0xf]
    %v249 = vld [vmem:[#allocation6 + $0x160] sm:$0xf]
    %v250 = vld [vmem:[#allocation6 + $0x164] sm:$0xf]
    %v251 = vld [vmem:[#allocation6 + $0x168] sm:$0xf]
    %v252 = vld [vmem:[#allocation6 + $0x16c] sm:$0xf]
    %v253 = vld [vmem:[#allocation6 + $0x170] sm:$0xf]
    %v254 = vld [vmem:[#allocation6 + $0x174] sm:$0xf]
    %v255 = vld [vmem:[#allocation6 + $0x178] sm:$0xf]
    %v256 = vld [vmem:[#allocation6 + $0x17c] sm:$0xf]
    %v257 = vld [vmem:[#allocation6 + $0x180] sm:$0xf]
    %v258 = vld [vmem:[#allocation6 + $0x184] sm:$0xf]
    %v259 = vld [vmem:[#allocation6 + $0x188] sm:$0xf]
    %v260 = vld [vmem:[#allocation6 + $0x18c] sm:$0xf]
    %v261 = vld [vmem:[#allocation6 + $0x190] sm:$0xf]
    %v262 = vld [vmem:[#allocation6 + $0x194] sm:$0xf]
    %v263 = vld [vmem:[#allocation6 + $0x198] sm:$0xf]
    %v264 = vld [vmem:[#allocation6 + $0x19c] sm:$0xf]
    %v265 = vld [vmem:[#allocation6 + $0x1a0] sm:$0xf]
    %v266 = vld [vmem:[#allocation6 + $0x1a4] sm:$0xf]
    %v267 = vld [vmem:[#allocation6 + $0x1a8] sm:$0xf]
    %v268 = vld [vmem:[#allocation6 + $0x1ac] sm:$0xf]
    %v269 = vld [vmem:[#allocation6 + $0x1b0] sm:$0xf]
    %v270 = vld [vmem:[#allocation6 + $0x1b4] sm:$0xf]
    %v271 = vld [vmem:[#allocation6 + $0x1b8] sm:$0xf]
    %v272 = vld [vmem:[#allocation6 + $0x1bc] sm:$0xf]
    %v273 = vld [vmem:[#allocation6 + $0x1c0] sm:$0xf]
    %v274 = vld [vmem:[#allocation6 + $0x1c4] sm:$0xf]
    %v275 = vld [vmem:[#allocation6 + $0x1c8] sm:$0xf]
    %v276 = vld [vmem:[#allocation6 + $0x1cc] sm:$0xf]
    %v277 = vld [vmem:[#allocation6 + $0x1d0] sm:$0xf]
    %v278 = vld [vmem:[#allocation6 + $0x1d4] sm:$0xf]
    %v279 = vld [vmem:[#allocation6 + $0x1d8] sm:$0xf]
    %v280 = vld [vmem:[#allocation6 + $0x1dc] sm:$0xf]
    %v281 = vld [vmem:[#allocation6 + $0x1e0] sm:$0xf]
    %v282 = vld [vmem:[#allocation6 + $0x1e4] sm:$0xf]
    %v283 = vld [vmem:[#allocation6 + $0x1e8] sm:$0xf]
    %v284 = vld [vmem:[#allocation6 + $0x1ec] sm:$0xf]
    %v285 = vld [vmem:[#allocation6 + $0x1f0] sm:$0xf]
    %v286 = vld [vmem:[#allocation6 + $0x1f4] sm:$0xf]
    %v287 = vld [vmem:[#allocation6 + $0x1f8] sm:$0xf]
    %v288 = vld [vmem:[#allocation6 + $0x1fc] sm:$0xf]
    %v417 = vunpack.c.l.b16 %v161
    %v418 = vunpack.c.l.b16 %v162
    %v419 = vunpack.c.l.b16 %v163
    %v420 = vunpack.c.l.b16 %v164
    %v421 = vunpack.c.l.b16 %v165
    %v422 = vunpack.c.l.b16 %v166
    %v423 = vunpack.c.l.b16 %v167
    %v424 = vunpack.c.l.b16 %v168
    %v425 = vunpack.c.l.b16 %v169
    %v426 = vunpack.c.l.b16 %v170
    %v427 = vunpack.c.l.b16 %v171
    %v428 = vunpack.c.l.b16 %v172
    %v429 = vunpack.c.l.b16 %v173
    %v430 = vunpack.c.l.b16 %v174
    %v431 = vunpack.c.l.b16 %v175
    %v432 = vunpack.c.l.b16 %v176
    %v433 = vunpack.c.l.b16 %v177
    %v434 = vunpack.c.l.b16 %v178
    %v435 = vunpack.c.l.b16 %v179
    %v436 = vunpack.c.l.b16 %v180
    %v437 = vunpack.c.l.b16 %v181
    %v438 = vunpack.c.l.b16 %v182
    %v439 = vunpack.c.l.b16 %v183
    %v440 = vunpack.c.l.b16 %v184
    %v441 = vunpack.c.l.b16 %v185
    %v442 = vunpack.c.l.b16 %v186
    %v443 = vunpack.c.l.b16 %v187
    %v444 = vunpack.c.l.b16 %v188
    %v445 = vunpack.c.l.b16 %v189
    %v446 = vunpack.c.l.b16 %v190
    %v447 = vunpack.c.l.b16 %v191
    %v448 = vunpack.c.l.b16 %v192
    %v449 = vunpack.c.l.b16 %v193
    %v450 = vunpack.c.l.b16 %v194
    %v451 = vunpack.c.l.b16 %v195
    %v452 = vunpack.c.l.b16 %v196
    %v453 = vunpack.c.l.b16 %v197
    %v454 = vunpack.c.l.b16 %v198
    %v455 = vunpack.c.l.b16 %v199
    %v456 = vunpack.c.l.b16 %v200
    %v457 = vunpack.c.l.b16 %v201
    %v458 = vunpack.c.l.b16 %v202
    %v459 = vunpack.c.l.b16 %v203
    %v460 = vunpack.c.l.b16 %v204
    %v461 = vunpack.c.l.b16 %v205
    %v462 = vunpack.c.l.b16 %v206
    %v463 = vunpack.c.l.b16 %v207
    %v464 = vunpack.c.l.b16 %v208
    %v465 = vunpack.c.l.b16 %v209
    %v466 = vunpack.c.l.b16 %v210
    %v467 = vunpack.c.l.b16 %v211
    %v468 = vunpack.c.l.b16 %v212
    %v469 = vunpack.c.l.b16 %v213
    %v470 = vunpack.c.l.b16 %v214
    %v471 = vunpack.c.l.b16 %v215
    %v472 = vunpack.c.l.b16 %v216
    %v473 = vunpack.c.l.b16 %v217
    %v474 = vunpack.c.l.b16 %v218
    %v475 = vunpack.c.l.b16 %v219
    %v476 = vunpack.c.l.b16 %v220
    %v477 = vunpack.c.l.b16 %v221
    %v478 = vunpack.c.l.b16 %v222
    %v479 = vunpack.c.l.b16 %v223
    %v480 = vunpack.c.l.b16 %v224
    %v481 = vunpack.c.l.b16 %v225
    %v482 = vunpack.c.l.b16 %v226
    %v483 = vunpack.c.l.b16 %v227
    %v484 = vunpack.c.l.b16 %v228
    %v485 = vunpack.c.l.b16 %v229
    %v486 = vunpack.c.l.b16 %v230
    %v487 = vunpack.c.l.b16 %v231
    %v488 = vunpack.c.l.b16 %v232
    %v489 = vunpack.c.l.b16 %v233
    %v490 = vunpack.c.l.b16 %v234
    %v491 = vunpack.c.l.b16 %v235
    %v492 = vunpack.c.l.b16 %v236
    %v493 = vunpack.c.l.b16 %v237
    %v494 = vunpack.c.l.b16 %v238
    %v495 = vunpack.c.l.b16 %v239
    %v496 = vunpack.c.l.b16 %v240
    %v497 = vunpack.c.l.b16 %v241
    %v498 = vunpack.c.l.b16 %v242
    %v499 = vunpack.c.l.b16 %v243
    %v500 = vunpack.c.l.b16 %v244
    %v501 = vunpack.c.l.b16 %v245
    %v502 = vunpack.c.l.b16 %v246
    %v503 = vunpack.c.l.b16 %v247
    %v504 = vunpack.c.l.b16 %v248
    %v505 = vunpack.c.l.b16 %v249
    %v506 = vunpack.c.l.b16 %v250
    %v507 = vunpack.c.l.b16 %v251
    %v508 = vunpack.c.l.b16 %v252
    %v509 = vunpack.c.l.b16 %v253
    %v510 = vunpack.c.l.b16 %v254
    %v511 = vunpack.c.l.b16 %v255
    %v512 = vunpack.c.l.b16 %v256
    %v513 = vunpack.c.l.b16 %v257
    %v514 = vunpack.c.l.b16 %v258
    %v515 = vunpack.c.l.b16 %v259
    %v516 = vunpack.c.l.b16 %v260
    %v517 = vunpack.c.l.b16 %v261
    %v518 = vunpack.c.l.b16 %v262
    %v519 = vunpack.c.l.b16 %v263
    %v520 = vunpack.c.l.b16 %v264
    %v521 = vunpack.c.l.b16 %v265
    %v522 = vunpack.c.l.b16 %v266
    %v523 = vunpack.c.l.b16 %v267
    %v524 = vunpack.c.l.b16 %v268
    %v525 = vunpack.c.l.b16 %v269
    %v526 = vunpack.c.l.b16 %v270
    %v527 = vunpack.c.l.b16 %v271
    %v528 = vunpack.c.l.b16 %v272
    %v529 = vunpack.c.l.b16 %v273
    %v530 = vunpack.c.l.b16 %v274
    %v531 = vunpack.c.l.b16 %v275
    %v532 = vunpack.c.l.b16 %v276
    %v533 = vunpack.c.l.b16 %v277
    %v534 = vunpack.c.l.b16 %v278
    %v535 = vunpack.c.l.b16 %v279
    %v536 = vunpack.c.l.b16 %v280
    %v537 = vunpack.c.l.b16 %v281
    %v538 = vunpack.c.l.b16 %v282
    %v539 = vunpack.c.l.b16 %v283
    %v540 = vunpack.c.l.b16 %v284
    %v541 = vunpack.c.l.b16 %v285
    %v542 = vunpack.c.l.b16 %v286
    %v543 = vunpack.c.l.b16 %v287
    %v544 = vunpack.c.l.b16 %v288
    %v545 = vpack.c.b16 %v418, %v417
    %v546 = vpack.c.b16 %v420, %v419
    %v547 = vpack.c.b16 %v422, %v421
    %v548 = vpack.c.b16 %v424, %v423
    %v549 = vpack.c.b16 %v426, %v425
    %v550 = vpack.c.b16 %v428, %v427
    %v551 = vpack.c.b16 %v430, %v429
    %v552 = vpack.c.b16 %v432, %v431
    %v553 = vpack.c.b16 %v434, %v433
    %v554 = vpack.c.b16 %v436, %v435
    %v555 = vpack.c.b16 %v438, %v437
    %v556 = vpack.c.b16 %v440, %v439
    %v557 = vpack.c.b16 %v442, %v441
    %v558 = vpack.c.b16 %v444, %v443
    %v559 = vpack.c.b16 %v446, %v445
    %v560 = vpack.c.b16 %v448, %v447
    %v561 = vpack.c.b16 %v450, %v449
    %v562 = vpack.c.b16 %v452, %v451
    %v563 = vpack.c.b16 %v454, %v453
    %v564 = vpack.c.b16 %v456, %v455
    %v565 = vpack.c.b16 %v458, %v457
    %v566 = vpack.c.b16 %v460, %v459
    %v567 = vpack.c.b16 %v462, %v461
    %v568 = vpack.c.b16 %v464, %v463
    %v569 = vpack.c.b16 %v466, %v465
    %v570 = vpack.c.b16 %v468, %v467
    %v571 = vpack.c.b16 %v470, %v469
    %v572 = vpack.c.b16 %v472, %v471
    %v573 = vpack.c.b16 %v474, %v473
    %v574 = vpack.c.b16 %v476, %v475
    %v575 = vpack.c.b16 %v478, %v477
    %v576 = vpack.c.b16 %v480, %v479
    %v577 = vpack.c.b16 %v482, %v481
    %v578 = vpack.c.b16 %v484, %v483
    %v579 = vpack.c.b16 %v486, %v485
    %v580 = vpack.c.b16 %v488, %v487
    %v581 = vpack.c.b16 %v490, %v489
    %v582 = vpack.c.b16 %v492, %v491
    %v583 = vpack.c.b16 %v494, %v493
    %v584 = vpack.c.b16 %v496, %v495
    %v585 = vpack.c.b16 %v498, %v497
    %v586 = vpack.c.b16 %v500, %v499
    %v587 = vpack.c.b16 %v502, %v501
    %v588 = vpack.c.b16 %v504, %v503
    %v589 = vpack.c.b16 %v506, %v505
    %v590 = vpack.c.b16 %v508, %v507
    %v591 = vpack.c.b16 %v510, %v509
    %v592 = vpack.c.b16 %v512, %v511
    %v593 = vpack.c.b16 %v514, %v513
    %v594 = vpack.c.b16 %v516, %v515
    %v595 = vpack.c.b16 %v518, %v517
    %v596 = vpack.c.b16 %v520, %v519
    %v597 = vpack.c.b16 %v522, %v521
    %v598 = vpack.c.b16 %v524, %v523
    %v599 = vpack.c.b16 %v526, %v525
    %v600 = vpack.c.b16 %v528, %v527
    %v601 = vpack.c.b16 %v530, %v529
    %v602 = vpack.c.b16 %v532, %v531
    %v603 = vpack.c.b16 %v534, %v533
    %v604 = vpack.c.b16 %v536, %v535
    %v605 = vpack.c.b16 %v538, %v537
    %v606 = vpack.c.b16 %v540, %v539
    %v607 = vpack.c.b16 %v542, %v541
    %v608 = vpack.c.b16 %v544, %v543
    %673 = vmatpush.bf16.msra.mxu0 %v552
    %674 = vmatpush.bf16.msra.mxu0 %v551
    %675 = vmatpush.bf16.msra.mxu0 %v550
    %676 = vmatpush.bf16.msra.mxu0 %v549
    %677 = vmatpush.bf16.msra.mxu0 %v548
    %678 = vmatpush.bf16.msra.mxu0 %v547
    %679 = vmatpush.bf16.msra.mxu0 %v546
    %680 = vmatpush.bf16.msra.mxu0 %v545
    %681 = vmatmul.bf16.gmra.mxu0 %v153
    %v682 = vpop.f32.mrf.mxu0
    %v683 = vadd.f32 0.0, %v682
    %v684 = vpop.f32.mrf.mxu0
    %v685 = vadd.f32 0.0, %v684
    %686 = vdwg.mxu0
    %687 = vmatpush.bf16.msra.mxu0 %v560
    %688 = vmatpush.bf16.msra.mxu0 %v559
    %689 = vmatpush.bf16.msra.mxu0 %v558
    %690 = vmatpush.bf16.msra.mxu0 %v557
    %691 = vmatpush.bf16.msra.mxu0 %v556
    %692 = vmatpush.bf16.msra.mxu0 %v555
    %693 = vmatpush.bf16.msra.mxu0 %v554
    %694 = vmatpush.bf16.msra.mxu0 %v553
    %695 = vmatmul.bf16.gmra.mxu0 %v154
    %v696 = vpop.f32.mrf.mxu0
    %v697 = vadd.f32 %v683, %v696
    %v698 = vpop.f32.mrf.mxu0
    %v699 = vadd.f32 %v685, %v698
    %700 = vdwg.mxu0
    %701 = vmatpush.bf16.msra.mxu0 %v568
    %702 = vmatpush.bf16.msra.mxu0 %v567
    %703 = vmatpush.bf16.msra.mxu0 %v566
    %704 = vmatpush.bf16.msra.mxu0 %v565
    %705 = vmatpush.bf16.msra.mxu0 %v564
    %706 = vmatpush.bf16.msra.mxu0 %v563
    %707 = vmatpush.bf16.msra.mxu0 %v562
    %708 = vmatpush.bf16.msra.mxu0 %v561
    %709 = vmatmul.bf16.gmra.mxu0 %v155
    %v710 = vpop.f32.mrf.mxu0
    %v711 = vadd.f32 %v697, %v710
    %v712 = vpop.f32.mrf.mxu0
    %v713 = vadd.f32 %v699, %v712
    %714 = vdwg.mxu0
    %715 = vmatpush.bf16.msra.mxu0 %v576
    %716 = vmatpush.bf16.msra.mxu0 %v575
    %717 = vmatpush.bf16.msra.mxu0 %v574
    %718 = vmatpush.bf16.msra.mxu0 %v573
    %719 = vmatpush.bf16.msra.mxu0 %v572
    %720 = vmatpush.bf16.msra.mxu0 %v571
    %721 = vmatpush.bf16.msra.mxu0 %v570
    %722 = vmatpush.bf16.msra.mxu0 %v569
    %723 = vmatmul.bf16.gmra.mxu0 %v156
    %v724 = vpop.f32.mrf.mxu0
    %v725 = vadd.f32 %v711, %v724
    %v726 = vpop.f32.mrf.mxu0
    %v727 = vadd.f32 %v713, %v726
    %728 = vdwg.mxu0
    %729 = vmatpush.bf16.msra.mxu0 %v584
    %730 = vmatpush.bf16.msra.mxu0 %v583
    %731 = vmatpush.bf16.msra.mxu0 %v582
    %732 = vmatpush.bf16.msra.mxu0 %v581
    %733 = vmatpush.bf16.msra.mxu0 %v580
    %734 = vmatpush.bf16.msra.mxu0 %v579
    %735 = vmatpush.bf16.msra.mxu0 %v578
    %736 = vmatpush.bf16.msra.mxu0 %v577
    %737 = vmatmul.bf16.gmra.mxu0 %v157
    %v738 = vpop.f32.mrf.mxu0
    %v739 = vadd.f32 %v725, %v738
    %v740 = vpop.f32.mrf.mxu0
    %v741 = vadd.f32 %v727, %v740
    %742 = vdwg.mxu0
    %743 = vmatpush.bf16.msra.mxu0 %v592
    %744 = vmatpush.bf16.msra.mxu0 %v591
    %745 = vmatpush.bf16.msra.mxu0 %v590
    %746 = vmatpush.bf16.msra.mxu0 %v589
    %747 = vmatpush.bf16.msra.mxu0 %v588
    %748 = vmatpush.bf16.msra.mxu0 %v587
    %749 = vmatpush.bf16.msra.mxu0 %v586
    %750 = vmatpush.bf16.msra.mxu0 %v585
    %751 = vmatmul.bf16.gmra.mxu0 %v158
    %v752 = vpop.f32.mrf.mxu0
    %v753 = vadd.f32 %v739, %v752
    %v754 = vpop.f32.mrf.mxu0
    %v755 = vadd.f32 %v741, %v754
    %756 = vdwg.mxu0
    %757 = vmatpush.bf16.msra.mxu0 %v600
    %758 = vmatpush.bf16.msra.mxu0 %v599
    %759 = vmatpush.bf16.msra.mxu0 %v598
    %760 = vmatpush.bf16.msra.mxu0 %v597
    %761 = vmatpush.bf16.msra.mxu0 %v596
    %762 = vmatpush.bf16.msra.mxu0 %v595
    %763 = vmatpush.bf16.msra.mxu0 %v594
    %764 = vmatpush.bf16.msra.mxu0 %v593
    %765 = vmatmul.bf16.gmra.mxu0 %v159
    %v766 = vpop.f32.mrf.mxu0
    %v767 = vadd.f32 %v753, %v766
    %v768 = vpop.f32.mrf.mxu0
    %v769 = vadd.f32 %v755, %v768
    %770 = vdwg.mxu0
    %771 = vmatpush.bf16.msra.mxu0 %v608
    %772 = vmatpush.bf16.msra.mxu0 %v607
    %773 = vmatpush.bf16.msra.mxu0 %v606
    %774 = vmatpush.bf16.msra.mxu0 %v605
    %775 = vmatpush.bf16.msra.mxu0 %v604
    %776 = vmatpush.bf16.msra.mxu0 %v603
    %777 = vmatpush.bf16.msra.mxu0 %v602
    %778 = vmatpush.bf16.msra.mxu0 %v601
    %779 = vmatmul.bf16.gmra.mxu0 %v160
    %v780 = vpop.f32.mrf.mxu0
    %v781 = vadd.f32 %v767, %v780
    %v782 = vpop.f32.mrf.mxu0
    %v783 = vadd.f32 %v769, %v782
    %784 = vdwg.mxu0
    %v785 = vadd.f32 %v135, %v781
    %v786 = vadd.f32 %v136, %v783
    %787 = vst [vmem:[#allocation2] sm:$0xff] %v785
    %788 = vst [vmem:[#allocation2 + $0x8] sm:$0xff] %v786
    // Predicated region
    $region86: #{tpu_custom_call.1} parent=1 // pred_check
      %p789 = pneg %p129
    $region87: #{tpu_custom_call.1} parent=1 // pred_check_branch
      %791 = sbr.rel (%p789) target = $region89
    $region88: #{tpu_custom_call.1} parent=1 // pred_region
      %v792 = vld [vmem:[#allocation2] sm:$0xff]
      %v793 = vld [vmem:[#allocation2 + $0x8] sm:$0xff]
      %v794 = vld [vmem:[%s2] sm:$0x1]
      %v796 = vperm.slane %v794, 0
      %v798 = vadd.f32 %v792, %v796
      %v799 = vadd.f32 %v793, %v796
      %800 = vadd.xlane.f32.xlu0 %v798
      %v801 = vpop.xlane.xlu0 %800
      %802 = vadd.xlane.f32.xlu0 %v799
      %v803 = vpop.xlane.xlu0 %802
      %v804 = vmul.f32 %v798, %v798
      %v805 = vmul.f32 %v799, %v799
      %806 = vadd.xlane.f32.xlu0 %v804
      %v807 = vpop.xlane.xlu0 %806
      %808 = vadd.xlane.f32.xlu0 %v805
      %v809 = vpop.xlane.xlu0 %808
      %v810 = vmul.f32 %v801, 0.03125
      %v811 = vmul.f32 %v803, 0.03125
      %v812 = vmul.f32 %v807, 0.03125
      %v813 = vmul.f32 %v809, 0.03125
      %v814 = vmul.f32 %v810, %v810
      %v815 = vmul.f32 %v811, %v811
      %v816 = vsub.f32 %v812, %v814
      %v817 = vsub.f32 %v813, %v815
      %v818 = vmax.f32 %v816, 0.0
      %v819 = vmax.f32 %v817, 0.0
      %v820 = vadd.f32 %v818, 1e-05
      %v821 = vadd.f32 %v819, 1e-05
      %v822 = vrsqrt.pop %v820
      %v823 = vmul.f32 %v822, %v820
      %v824 = vmul.f32 %v823, %v822
      %v825 = vmul.f32 0.5, %v824
      %v826 = vsub.f32 1.5, %v825
      %v827 = vmul.f32 %v822, %v826
      %vm828 = vweird.f32 %v820
      %vm829 = vweird.f32 %v822
      %vm830 = vmor %vm828, %vm829
      %v831 = vsel %vm830, %v822, %v827
      %v832 = vrsqrt.pop %v821
      %v833 = vmul.f32 %v832, %v821
      %v834 = vmul.f32 %v833, %v832
      %v835 = vmul.f32 0.5, %v834
      %v836 = vsub.f32 1.5, %v835
      %v837 = vmul.f32 %v832, %v836
      %vm838 = vweird.f32 %v821
      %vm839 = vweird.f32 %v832
      %vm840 = vmor %vm838, %vm839
      %v841 = vsel %vm840, %v832, %v837
      %v842 = vsub.f32 %v798, %v810
      %v843 = vsub.f32 %v799, %v811
      %v844 = vmul.f32 %v842, %v831
      %v845 = vmul.f32 %v843, %v841
      %v846 = vpack.c.bf16 %v844, %v844
      %v847 = vpack.c.bf16 %v845, %v845
      %v848 = vld [vmem:[%s3] sm:$0x1]
      %v849 = vpack.c.bf16 %v848, %v848
      %v851 = vpack.i.b16 %v849, %v849
      %v853 = vperm.slane %v851, 0
      %v854 = vunpack.c.l.bf16 %v846
      %v855 = vunpack.c.l.bf16 %v847
      %v856 = vunpack.c.l.bf16 %v853
      %v857 = vmul.f32 %v854, %v856
      %v858 = vmul.f32 %v855, %v856
      %v859 = vpack.c.bf16 %v857, %v857
      %v860 = vpack.c.bf16 %v858, %v858
      %v861 = vld [vmem:[%s4] sm:$0x1]
      %v862 = vpack.c.bf16 %v861, %v861
      %v864 = vpack.i.b16 %v862, %v862
      %v866 = vperm.slane %v864, 0
      %v867 = vunpack.c.l.bf16 %v859
      %v868 = vunpack.c.l.bf16 %v860
      %v869 = vunpack.c.l.bf16 %v866
      %v870 = vadd.f32 %v867, %v869
      %v871 = vadd.f32 %v868, %v869
      %v872 = vpack.c.bf16 %v870, %v870
      %v873 = vpack.c.bf16 %v871, %v871
      %v874 = vunpack.c.l.bf16 %v872
      %v875 = vunpack.c.l.bf16 %v873
      %v876 = vmax.f32 %v874, 0.0
      %v877 = vmax.f32 %v875, 0.0
      %v878 = vpack.c.bf16 %v877, %v876
      %v879 = vld [vmem:[#allocation8] sm:$0xf]
      %v880 = vld [vmem:[#allocation8 + $0x4] sm:$0xf]
      %v881 = vld [vmem:[#allocation8 + $0x8] sm:$0xf]
      %v882 = vld [vmem:[#allocation8 + $0xc] sm:$0xf]
      %v883 = vld [vmem:[#allocation8 + $0x10] sm:$0xf]
      %v884 = vld [vmem:[#allocation8 + $0x14] sm:$0xf]
      %v885 = vld [vmem:[#allocation8 + $0x18] sm:$0xf]
      %v886 = vld [vmem:[#allocation8 + $0x1c] sm:$0xf]
      %v887 = vld [vmem:[#allocation8 + $0x20] sm:$0xf]
      %v888 = vld [vmem:[#allocation8 + $0x24] sm:$0xf]
      %v889 = vld [vmem:[#allocation8 + $0x28] sm:$0xf]
      %v890 = vld [vmem:[#allocation8 + $0x2c] sm:$0xf]
      %v891 = vld [vmem:[#allocation8 + $0x30] sm:$0xf]
      %v892 = vld [vmem:[#allocation8 + $0x34] sm:$0xf]
      %v893 = vld [vmem:[#allocation8 + $0x38] sm:$0xf]
      %v894 = vld [vmem:[#allocation8 + $0x3c] sm:$0xf]
      %v895 = vld [vmem:[%s6] sm:$0x1]
      %v897 = vperm.slane %v895, 0
      %v915 = vunpack.c.l.b16 %v879
      %v916 = vunpack.c.l.b16 %v880
      %v917 = vunpack.c.l.b16 %v881
      %v918 = vunpack.c.l.b16 %v882
      %v919 = vunpack.c.l.b16 %v883
      %v920 = vunpack.c.l.b16 %v884
      %v921 = vunpack.c.l.b16 %v885
      %v922 = vunpack.c.l.b16 %v886
      %v923 = vunpack.c.l.b16 %v887
      %v924 = vunpack.c.l.b16 %v888
      %v925 = vunpack.c.l.b16 %v889
      %v926 = vunpack.c.l.b16 %v890
      %v927 = vunpack.c.l.b16 %v891
      %v928 = vunpack.c.l.b16 %v892
      %v929 = vunpack.c.l.b16 %v893
      %v930 = vunpack.c.l.b16 %v894
      %v931 = vpack.c.b16 %v916, %v915
      %v932 = vpack.c.b16 %v918, %v917
      %v933 = vpack.c.b16 %v920, %v919
      %v934 = vpack.c.b16 %v922, %v921
      %v935 = vpack.c.b16 %v924, %v923
      %v936 = vpack.c.b16 %v926, %v925
      %v937 = vpack.c.b16 %v928, %v927
      %v938 = vpack.c.b16 %v930, %v929
      %947 = vmatpush.bf16.msra.mxu0 %v938
      %948 = vmatpush.bf16.msra.mxu0 %v937
      %949 = vmatpush.bf16.msra.mxu0 %v936
      %950 = vmatpush.bf16.msra.mxu0 %v935
      %951 = vmatpush.bf16.msra.mxu0 %v934
      %952 = vmatpush.bf16.msra.mxu0 %v933
      %953 = vmatpush.bf16.msra.mxu0 %v932
      %954 = vmatpush.bf16.msra.mxu0 %v931
      %955 = vmatmul.bf16.gmra.mxu0 %v878
      %v956 = vpop.f32.mrf.mxu0
      %v957 = vadd.f32 %v897, %v956
      %v958 = vpop.f32.mrf.mxu0
      %v959 = vadd.f32 %v897, %v958
      %960 = vdwg.mxu0
      %961 = vadd.xlane.f32.xlu0 %v957
      %v962 = vpop.xlane.xlu0 %961
      %963 = vadd.xlane.f32.xlu0 %v959
      %v964 = vpop.xlane.xlu0 %963
      %v965 = vmul.f32 %v957, %v957
      %v966 = vmul.f32 %v959, %v959
      %967 = vadd.xlane.f32.xlu0 %v965
      %v968 = vpop.xlane.xlu0 %967
      %969 = vadd.xlane.f32.xlu0 %v966
      %v970 = vpop.xlane.xlu0 %969
      %v971 = vmul.f32 %v962, 0.03125
      %v972 = vmul.f32 %v964, 0.03125
      %v973 = vmul.f32 %v968, 0.03125
      %v974 = vmul.f32 %v970, 0.03125
      %v975 = vmul.f32 %v971, %v971
      %v976 = vmul.f32 %v972, %v972
      %v977 = vsub.f32 %v973, %v975
      %v978 = vsub.f32 %v974, %v976
      %v979 = vmax.f32 %v977, 0.0
      %v980 = vmax.f32 %v978, 0.0
      %v981 = vadd.f32 %v979, 1e-05
      %v982 = vadd.f32 %v980, 1e-05
      %v983 = vrsqrt.pop %v981
      %v984 = vmul.f32 %v983, %v981
      %v985 = vmul.f32 %v984, %v983
      %v986 = vmul.f32 0.5, %v985
      %v987 = vsub.f32 1.5, %v986
      %v988 = vmul.f32 %v983, %v987
      %vm989 = vweird.f32 %v981
      %vm990 = vweird.f32 %v983
      %vm991 = vmor %vm989, %vm990
      %v992 = vsel %vm991, %v983, %v988
      %v993 = vrsqrt.pop %v982
      %v994 = vmul.f32 %v993, %v982
      %v995 = vmul.f32 %v994, %v993
      %v996 = vmul.f32 0.5, %v995
      %v997 = vsub.f32 1.5, %v996
      %v998 = vmul.f32 %v993, %v997
      %vm999 = vweird.f32 %v982
      %vm1000 = vweird.f32 %v993
      %vm1001 = vmor %vm999, %vm1000
      %v1002 = vsel %vm1001, %v993, %v998
      %v1003 = vsub.f32 %v957, %v971
      %v1004 = vsub.f32 %v959, %v972
      %v1005 = vmul.f32 %v1003, %v992
      %v1006 = vmul.f32 %v1004, %v1002
      %v1007 = vpack.c.bf16 %v1005, %v1005
      %v1008 = vpack.c.bf16 %v1006, %v1006
      %v1009 = vld [vmem:[%s7] sm:$0x1]
      %v1010 = vpack.c.bf16 %v1009, %v1009
      %v1012 = vpack.i.b16 %v1010, %v1010
      %v1014 = vperm.slane %v1012, 0
      %v1015 = vunpack.c.l.bf16 %v1007
      %v1016 = vunpack.c.l.bf16 %v1008
      %v1017 = vunpack.c.l.bf16 %v1014
      %v1018 = vmul.f32 %v1015, %v1017
      %v1019 = vmul.f32 %v1016, %v1017
      %v1020 = vpack.c.bf16 %v1018, %v1018
      %v1021 = vpack.c.bf16 %v1019, %v1019
      %v1022 = vld [vmem:[%s8] sm:$0x1]
      %v1023 = vpack.c.bf16 %v1022, %v1022
      %v1025 = vpack.i.b16 %v1023, %v1023
      %v1027 = vperm.slane %v1025, 0
      %v1028 = vunpack.c.l.bf16 %v1020
      %v1029 = vunpack.c.l.bf16 %v1021
      %v1030 = vunpack.c.l.bf16 %v1027
      %v1031 = vadd.f32 %v1028, %v1030
      %v1032 = vadd.f32 %v1029, %v1030
      %v1033 = vpack.c.bf16 %v1031, %v1031
      %v1034 = vpack.c.bf16 %v1032, %v1032
      %v1035 = vunpack.c.l.bf16 %v1033
      %v1036 = vunpack.c.l.bf16 %v1034
      %v1037 = vmax.f32 %v1035, 0.0
      %v1038 = vmax.f32 %v1036, 0.0
      %v1039 = vpack.c.bf16 %v1038, %v1037
      %v1040 = vld [vmem:[#allocation9] sm:$0xf]
      %v1041 = vld [vmem:[#allocation9 + $0x4] sm:$0xf]
      %v1042 = vld [vmem:[#allocation9 + $0x8] sm:$0xf]
      %v1043 = vld [vmem:[#allocation9 + $0xc] sm:$0xf]
      %v1044 = vld [vmem:[#allocation9 + $0x10] sm:$0xf]
      %v1045 = vld [vmem:[#allocation9 + $0x14] sm:$0xf]
      %v1046 = vld [vmem:[#allocation9 + $0x18] sm:$0xf]
      %v1047 = vld [vmem:[#allocation9 + $0x1c] sm:$0xf]
      %v1048 = vld [vmem:[#allocation9 + $0x20] sm:$0xf]
      %v1049 = vld [vmem:[#allocation9 + $0x24] sm:$0xf]
      %v1050 = vld [vmem:[#allocation9 + $0x28] sm:$0xf]
      %v1051 = vld [vmem:[#allocation9 + $0x2c] sm:$0xf]
      %v1052 = vld [vmem:[#allocation9 + $0x30] sm:$0xf]
      %v1053 = vld [vmem:[#allocation9 + $0x34] sm:$0xf]
      %v1054 = vld [vmem:[#allocation9 + $0x38] sm:$0xf]
      %v1055 = vld [vmem:[#allocation9 + $0x3c] sm:$0xf]
      %v1056 = vld [vmem:[%s10] sm:$0x1]
      %v1058 = vperm.slane %v1056, 0
      %v1076 = vunpack.c.l.b16 %v1040
      %v1077 = vunpack.c.l.b16 %v1041
      %v1078 = vunpack.c.l.b16 %v1042
      %v1079 = vunpack.c.l.b16 %v1043
      %v1080 = vunpack.c.l.b16 %v1044
      %v1081 = vunpack.c.l.b16 %v1045
      %v1082 = vunpack.c.l.b16 %v1046
      %v1083 = vunpack.c.l.b16 %v1047
      %v1084 = vunpack.c.l.b16 %v1048
      %v1085 = vunpack.c.l.b16 %v1049
      %v1086 = vunpack.c.l.b16 %v1050
      %v1087 = vunpack.c.l.b16 %v1051
      %v1088 = vunpack.c.l.b16 %v1052
      %v1089 = vunpack.c.l.b16 %v1053
      %v1090 = vunpack.c.l.b16 %v1054
      %v1091 = vunpack.c.l.b16 %v1055
      %v1092 = vpack.c.b16 %v1077, %v1076
      %v1093 = vpack.c.b16 %v1079, %v1078
      %v1094 = vpack.c.b16 %v1081, %v1080
      %v1095 = vpack.c.b16 %v1083, %v1082
      %v1096 = vpack.c.b16 %v1085, %v1084
      %v1097 = vpack.c.b16 %v1087, %v1086
      %v1098 = vpack.c.b16 %v1089, %v1088
      %v1099 = vpack.c.b16 %v1091, %v1090
      %1108 = vmatpush.bf16.msra.mxu0 %v1099
      %1109 = vmatpush.bf16.msra.mxu0 %v1098
      %1110 = vmatpush.bf16.msra.mxu0 %v1097
      %1111 = vmatpush.bf16.msra.mxu0 %v1096
      %1112 = vmatpush.bf16.msra.mxu0 %v1095
      %1113 = vmatpush.bf16.msra.mxu0 %v1094
      %1114 = vmatpush.bf16.msra.mxu0 %v1093
      %1115 = vmatpush.bf16.msra.mxu0 %v1092
      %1116 = vmatmul.bf16.gmra.mxu0 %v1039
      %v1117 = vpop.f32.mrf.mxu0
      %v1118 = vadd.f32 %v1058, %v1117
      %v1119 = vpop.f32.mrf.mxu0
      %v1120 = vadd.f32 %v1058, %v1119
      %1121 = vdwg.mxu0
      %1122 = vadd.xlane.f32.xlu0 %v1118
      %v1123 = vpop.xlane.xlu0 %1122
      %1124 = vadd.xlane.f32.xlu0 %v1120
      %v1125 = vpop.xlane.xlu0 %1124
      %v1126 = vmul.f32 %v1118, %v1118
      %v1127 = vmul.f32 %v1120, %v1120
      %1128 = vadd.xlane.f32.xlu0 %v1126
      %v1129 = vpop.xlane.xlu0 %1128
      %1130 = vadd.xlane.f32.xlu0 %v1127
      %v1131 = vpop.xlane.xlu0 %1130
      %v1132 = vmul.f32 %v1123, 0.03125
      %v1133 = vmul.f32 %v1125, 0.03125
      %v1134 = vmul.f32 %v1129, 0.03125
      %v1135 = vmul.f32 %v1131, 0.03125
      %v1136 = vmul.f32 %v1132, %v1132
      %v1137 = vmul.f32 %v1133, %v1133
      %v1138 = vsub.f32 %v1134, %v1136
      %v1139 = vsub.f32 %v1135, %v1137
      %v1140 = vmax.f32 %v1138, 0.0
      %v1141 = vmax.f32 %v1139, 0.0
      %v1142 = vadd.f32 %v1140, 1e-05
      %v1143 = vadd.f32 %v1141, 1e-05
      %v1144 = vrsqrt.pop %v1142
      %v1145 = vmul.f32 %v1144, %v1142
      %v1146 = vmul.f32 %v1145, %v1144
      %v1147 = vmul.f32 0.5, %v1146
      %v1148 = vsub.f32 1.5, %v1147
      %v1149 = vmul.f32 %v1144, %v1148
      %vm1150 = vweird.f32 %v1142
      %vm1151 = vweird.f32 %v1144
      %vm1152 = vmor %vm1150, %vm1151
      %v1153 = vsel %vm1152, %v1144, %v1149
      %v1154 = vrsqrt.pop %v1143
      %v1155 = vmul.f32 %v1154, %v1143
      %v1156 = vmul.f32 %v1155, %v1154
      %v1157 = vmul.f32 0.5, %v1156
      %v1158 = vsub.f32 1.5, %v1157
      %v1159 = vmul.f32 %v1154, %v1158
      %vm1160 = vweird.f32 %v1143
      %vm1161 = vweird.f32 %v1154
      %vm1162 = vmor %vm1160, %vm1161
      %v1163 = vsel %vm1162, %v1154, %v1159
      %v1164 = vsub.f32 %v1118, %v1132
      %v1165 = vsub.f32 %v1120, %v1133
      %v1166 = vmul.f32 %v1164, %v1153
      %v1167 = vmul.f32 %v1165, %v1163
      %v1168 = vpack.c.bf16 %v1166, %v1166
      %v1169 = vpack.c.bf16 %v1167, %v1167
      %v1170 = vld [vmem:[%s11] sm:$0x1]
      %v1171 = vpack.c.bf16 %v1170, %v1170
      %v1173 = vpack.i.b16 %v1171, %v1171
      %v1175 = vperm.slane %v1173, 0
      %v1176 = vunpack.c.l.bf16 %v1168
      %v1177 = vunpack.c.l.bf16 %v1169
      %v1178 = vunpack.c.l.bf16 %v1175
      %v1179 = vmul.f32 %v1176, %v1178
      %v1180 = vmul.f32 %v1177, %v1178
      %v1181 = vpack.c.bf16 %v1179, %v1179
      %v1182 = vpack.c.bf16 %v1180, %v1180
      %v1183 = vld [vmem:[%s12] sm:$0x1]
      %v1184 = vpack.c.bf16 %v1183, %v1183
      %v1186 = vpack.i.b16 %v1184, %v1184
      %v1188 = vperm.slane %v1186, 0
      %v1189 = vunpack.c.l.bf16 %v1181
      %v1190 = vunpack.c.l.bf16 %v1182
      %v1191 = vunpack.c.l.bf16 %v1188
      %v1192 = vadd.f32 %v1189, %v1191
      %v1193 = vadd.f32 %v1190, %v1191
      %v1194 = vpack.c.bf16 %v1192, %v1192
      %v1195 = vpack.c.bf16 %v1193, %v1193
      %v1196 = vunpack.c.l.bf16 %v1194
      %v1197 = vunpack.c.l.bf16 %v1195
      %v1198 = vmax.f32 %v1196, 0.0
      %v1199 = vmax.f32 %v1197, 0.0
      %v1200 = vpack.c.bf16 %v1199, %v1198
      %v1201 = vld [vmem:[#allocation11] sm:$0xf]
      %v1202 = vld [vmem:[#allocation11 + $0x4] sm:$0xf]
      %v1203 = vld [vmem:[#allocation11 + $0x8] sm:$0xf]
      %v1204 = vld [vmem:[#allocation11 + $0xc] sm:$0xf]
      %v1205 = vld [vmem:[#allocation11 + $0x10] sm:$0xf]
      %v1206 = vld [vmem:[#allocation11 + $0x14] sm:$0xf]
      %v1207 = vld [vmem:[#allocation11 + $0x18] sm:$0xf]
      %v1208 = vld [vmem:[#allocation11 + $0x1c] sm:$0xf]
      %v1209 = vld [vmem:[#allocation11 + $0x20] sm:$0xf]
      %v1210 = vld [vmem:[#allocation11 + $0x24] sm:$0xf]
      %v1211 = vld [vmem:[#allocation11 + $0x28] sm:$0xf]
      %v1212 = vld [vmem:[#allocation11 + $0x2c] sm:$0xf]
      %v1213 = vld [vmem:[#allocation11 + $0x30] sm:$0xf]
      %v1214 = vld [vmem:[#allocation11 + $0x34] sm:$0xf]
      %v1215 = vld [vmem:[#allocation11 + $0x38] sm:$0xf]
      %v1216 = vld [vmem:[#allocation11 + $0x3c] sm:$0xf]
      %v1217 = vld [vmem:[%s14] sm:$0x1]
      %v1219 = vperm.slane %v1217, 0
      %v1237 = vunpack.c.l.b16 %v1201
      %v1238 = vunpack.c.l.b16 %v1202
      %v1239 = vunpack.c.l.b16 %v1203
      %v1240 = vunpack.c.l.b16 %v1204
      %v1241 = vunpack.c.l.b16 %v1205
      %v1242 = vunpack.c.l.b16 %v1206
      %v1243 = vunpack.c.l.b16 %v1207
      %v1244 = vunpack.c.l.b16 %v1208
      %v1245 = vunpack.c.l.b16 %v1209
      %v1246 = vunpack.c.l.b16 %v1210
      %v1247 = vunpack.c.l.b16 %v1211
      %v1248 = vunpack.c.l.b16 %v1212
      %v1249 = vunpack.c.l.b16 %v1213
      %v1250 = vunpack.c.l.b16 %v1214
      %v1251 = vunpack.c.l.b16 %v1215
      %v1252 = vunpack.c.l.b16 %v1216
      %v1253 = vpack.c.b16 %v1238, %v1237
      %v1254 = vpack.c.b16 %v1240, %v1239
      %v1255 = vpack.c.b16 %v1242, %v1241
      %v1256 = vpack.c.b16 %v1244, %v1243
      %v1257 = vpack.c.b16 %v1246, %v1245
      %v1258 = vpack.c.b16 %v1248, %v1247
      %v1259 = vpack.c.b16 %v1250, %v1249
      %v1260 = vpack.c.b16 %v1252, %v1251
      %1269 = vmatpush.bf16.msra.mxu0 %v1260
      %1270 = vmatpush.bf16.msra.mxu0 %v1259
      %1271 = vmatpush.bf16.msra.mxu0 %v1258
      %1272 = vmatpush.bf16.msra.mxu0 %v1257
      %1273 = vmatpush.bf16.msra.mxu0 %v1256
      %1274 = vmatpush.bf16.msra.mxu0 %v1255
      %1275 = vmatpush.bf16.msra.mxu0 %v1254
      %1276 = vmatpush.bf16.msra.mxu0 %v1253
      %1277 = vmatmul.bf16.gmra.mxu0 %v1200
      %v1278 = vpop.f32.mrf.mxu0
      %v1279 = vadd.f32 %v1219, %v1278
      %v1280 = vpop.f32.mrf.mxu0
      %v1281 = vadd.f32 %v1219, %v1280
      %1282 = vdwg.mxu0
      %1283 = vst [vmem:[#allocation12] sm:$0xff] %v1279
      %1284 = vst [vmem:[#allocation12 + $0x8] sm:$0xff] %v1281
    $region89: #{tpu_custom_call.1} parent=1 // pred_fallthru
      _
    // Predicated region
    $region90: #{tpu_custom_call.1} parent=1 // pred_check
      _
    $region91: #{tpu_custom_call.1} parent=1 // pred_check_branch
      %1286 = sbr.rel (0) target = $region93
    $region92: #{tpu_custom_call.1} parent=1 // pred_region
      %1288 = vsyncadd [#allocation5], 0
      %s1289 = sshll.u32 [#allocation12], 4
      %s1290 = int_to_ptr.vmem [resolvable:$true] %s1289
      %s1291 = sshll.u32 %s15, 4
      %s1292 = int_to_ptr.hbm [resolvable:$true] %s1291
      %1297 = dma.vmem_to_hbm [thread:$0]  %s1290, 256, %s1292, [#allocation5], 128, 128, 8
    $region93: #{tpu_custom_call.1} parent=1 // pred_fallthru
      _
    // Predicated region
    $region94: #{tpu_custom_call.1} parent=1 // pred_check
      _
    $region95: #{tpu_custom_call.1} parent=1 // pred_check_branch
      %1299 = sbr.rel (0) target = $region97
    $region96: #{tpu_custom_call.1} parent=1 // pred_region
      %1301 = dma.done [#allocation5], 256
    $region97: #{tpu_custom_call.1} parent=1 // pred_fallthru
      _
    %1302 = vsyncpa [#allocation4], 1
    %1303 = vsyncpa [#allocation7], 1
    %1304 = vsyncpa [#allocation10], 1
    %1305 = vsyncpa [#allocation5], 1

</llo_original>
